<compile_context>
chip_gen: v7x
topology: tpu7x:2x2x1
jax: 0.10.0
libtpu: 0.0.40
codegen_flags: <defaults>
</compile_context>

<pallas_src>
import jax
import jax.numpy as jnp
from jax import lax
from jax.experimental import pallas as pl
from jax.experimental.pallas import tpu as pltpu

EPS = 1e-5
C_OUT = 64
_VMEM_LIMIT = 32 * 1024 * 1024  # explicit scoped-VMEM budget (safe on v5e/v6e/v7x)


def _pick_tile_n(n):
    """Largest lane-dense tile that divides N; falls back to a single full-N tile."""
    for t in (1024, 512, 256, 128):
        if n % t == 0:
            return t
    return n  # TODO(synk): irregular large N falls back to one tile along N (no remainder masking)


def _first_step():
    return jnp.logical_and(pl.program_id(0) == 0, pl.program_id(1) == 0)


# ---------------------------------------------------------------------------
# Pass A: h1 = W1 @ x (bias dropped: cancels under BN); accumulate per-channel sum / sumsq.
# ---------------------------------------------------------------------------
def _stats1_kernel(x_ref, w1_ref, sum_ref, ssq_ref):
    @pl.when(_first_step())
    def _():
        sum_ref[...] = jnp.zeros_like(sum_ref)
        ssq_ref[...] = jnp.zeros_like(ssq_ref)

    h = jnp.dot(w1_ref[...], x_ref[...], preferred_element_type=jnp.float32)  # (64, tile_n)
    sum_ref[...] += jnp.sum(h, axis=1, keepdims=True)
    ssq_ref[...] += jnp.sum(h * h, axis=1, keepdims=True)


# ---------------------------------------------------------------------------
# Pass B: recompute conv1, apply folded bn1 + relu, conv2; accumulate bn2 sum / sumsq.
# ---------------------------------------------------------------------------
def _stats2_kernel(x_ref, w1_ref, p1_ref, w2_ref, sum_ref, ssq_ref):
    @pl.when(_first_step())
    def _():
        sum_ref[...] = jnp.zeros_like(sum_ref)
        ssq_ref[...] = jnp.zeros_like(ssq_ref)

    h1 = jnp.dot(w1_ref[...], x_ref[...], preferred_element_type=jnp.float32)
    h1 = jnp.maximum(h1 * p1_ref[:, 0:1] + p1_ref[:, 1:2], 0.0)
    h2 = jnp.dot(w2_ref[...], h1, preferred_element_type=jnp.float32)
    sum_ref[...] += jnp.sum(h2, axis=1, keepdims=True)
    ssq_ref[...] += jnp.sum(h2 * h2, axis=1, keepdims=True)


# ---------------------------------------------------------------------------
# Pass C: full recompute with folded bn1/bn2 (scale/shift) and lane-dense NCW output write.
# ---------------------------------------------------------------------------
def _apply_kernel(x_ref, w1_ref, p_ref, w2_ref, o_ref):
    h1 = jnp.dot(w1_ref[...], x_ref[...], preferred_element_type=jnp.float32)
    h1 = jnp.maximum(h1 * p_ref[:, 0:1] + p_ref[:, 1:2], 0.0)
    h2 = jnp.dot(w2_ref[...], h1, preferred_element_type=jnp.float32)
    o_ref[...] = jnp.maximum(h2 * p_ref[:, 2:3] + p_ref[:, 3:4], 0.0).astype(o_ref.dtype)


def s_mlp_1_forward(x, params):
    """x: (B, 3, N) float32 -> (B, 64, N) float32 (training-mode BN semantics)."""
    w1, b1, g1, bt1, w2, b2, g2, bt2 = params  # b1/b2 unused: exactly cancelled by BN mean subtraction
    B, c_in, N = x.shape
    assert c_in == 3
    M = B * N
    tile_n = _pick_tile_n(N)
    grid = (B, N // tile_n)

    x_spec = pl.BlockSpec((None, c_in, tile_n), lambda b, t: (b, 0, t))
    w1_spec = pl.BlockSpec((C_OUT, c_in), lambda b, t: (0, 0))
    w2_spec = pl.BlockSpec((C_OUT, C_OUT), lambda b, t: (0, 0))
    stat_spec = pl.BlockSpec((C_OUT, 1), lambda b, t: (0, 0))
    stat_shape = jax.ShapeDtypeStruct((C_OUT, 1), jnp.float32)

    acc_params = pltpu.CompilerParams(
        dimension_semantics=("arbitrary", "arbitrary"),
        vmem_limit_bytes=_VMEM_LIMIT)
    par_params = pltpu.CompilerParams(
        dimension_semantics=("parallel", "parallel"),
        vmem_limit_bytes=_VMEM_LIMIT)

    # ---- pass A: bn1 statistics of conv1 (bias-free) ----
    s1, ss1 = pl.pallas_call(
        _stats1_kernel,
        out_shape=(stat_shape, stat_shape),
        grid=grid,
        in_specs=[x_spec, w1_spec],
        out_specs=(stat_spec, stat_spec),
        compiler_params=acc_params,
    )(x, w1)

    inv_m = 1.0 / M
    mean1 = s1 * inv_m
    var1 = jnp.maximum(ss1 * inv_m - mean1 * mean1, 0.0)   # biased variance (PyTorch train-mode norm)
    scale1 = g1.reshape(C_OUT, 1) * lax.rsqrt(var1 + EPS)
    shift1 = bt1.reshape(C_OUT, 1) - mean1 * scale1        # conv bias b1 cancels exactly
    p1 = jnp.concatenate([scale1, shift1], axis=1)          # (64, 2) packed per-channel params
    p1_spec = pl.BlockSpec((C_OUT, 2), lambda b, t: (0, 0))

    # ---- pass B: bn2 statistics of conv2(relu(bn1(conv1 x))) ----
    s2, ss2 = pl.pallas_call(
        _stats2_kernel,
        out_shape=(stat_shape, stat_shape),
        grid=grid,
        in_specs=[x_spec, w1_spec, p1_spec, w2_spec],
        out_specs=(stat_spec, stat_spec),
        compiler_params=acc_params,
    )(x, w1, p1, w2)

    mean2 = s2 * inv_m
    var2 = jnp.maximum(ss2 * inv_m - mean2 * mean2, 0.0)
    scale2 = g2.reshape(C_OUT, 1) * lax.rsqrt(var2 + EPS)
    shift2 = bt2.reshape(C_OUT, 1) - mean2 * scale2        # conv bias b2 cancels exactly
    p_all = jnp.concatenate([scale1, shift1, scale2, shift2], axis=1)  # (64, 4)
    p_all_spec = pl.BlockSpec((C_OUT, 4), lambda b, t: (0, 0))

    # ---- pass C: normalize + write NCW output with lane-dense tiles ----
    y = pl.pallas_call(
        _apply_kernel,
        out_shape=jax.ShapeDtypeStruct((B, C_OUT, N), jnp.float32),
        grid=grid,
        in_specs=[x_spec, w1_spec, p_all_spec, w2_spec],
        out_specs=pl.BlockSpec((None, C_OUT, tile_n), lambda b, t: (b, 0, t)),
        compiler_params=par_params,
    )(x, w1, p_all, w2)
    return y


def init_params(key):
    """PyTorch-shaped params: conv weights (C_out, C_in), biases (C_out,), BN gamma=1, beta=0."""
    k1, k2, k3, k4 = jax.random.split(key, 4)
    bound1 = 1.0 / jnp.sqrt(3.0)
    bound2 = 1.0 / jnp.sqrt(64.0)
    w1 = jax.random.uniform(k1, (C_OUT, 3), jnp.float32, -bound1, bound1)
    b1 = jax.random.uniform(k2, (C_OUT,), jnp.float32, -bound1, bound1)
    w2 = jax.random.uniform(k3, (C_OUT, C_OUT), jnp.float32, -bound2, bound2)
    b2 = jax.random.uniform(k4, (C_OUT,), jnp.float32, -bound2, bound2)
    g1 = jnp.ones((C_OUT,), jnp.float32)
    bt1 = jnp.zeros((C_OUT,), jnp.float32)
    g2 = jnp.ones((C_OUT,), jnp.float32)
    bt2 = jnp.zeros((C_OUT,), jnp.float32)
    return (w1, b1, g1, bt1, w2, b2, g2, bt2)


def _reference(x, params):
    """Pure-JAX reference matching the PyTorch forward (training-mode BN, with conv biases)."""
    w1, b1, g1, bt1, w2, b2, g2, bt2 = params
    h = jnp.einsum('oc,bcn->bon', w1, x) + b1[None, :, None]
    m = jnp.mean(h, axis=(0, 2), keepdims=True)
    v = jnp.mean((h - m) ** 2, axis=(0, 2), keepdims=True)
    h = (h - m) / jnp.sqrt(v + EPS) * g1[None, :, None] + bt1[None, :, None]
    h = jnp.maximum(h, 0.0)
    h = jnp.einsum('oc,bcn->bon', w2, h) + b2[None, :, None]
    m = jnp.mean(h, axis=(0, 2), keepdims=True)
    v = jnp.mean((h - m) ** 2, axis=(0, 2), keepdims=True)
    h = (h - m) / jnp.sqrt(v + EPS) * g2[None, :, None] + bt2[None, :, None]
    return jnp.maximum(h, 0.0)


if __name__ == "__main__":
    key = jax.random.PRNGKey(0)
    kx, kx2, kp = jax.random.split(key, 3)
    params = init_params(kp)
    fwd = jax.jit(s_mlp_1_forward)

    # Small shape consistent with the module: 2 point clouds, 16 points, 3 input channels.
    B, N = 2, 16
    x = jax.random.normal(kx, (B, 3, N), jnp.float32)
    out = jax.block_until_ready(fwd(x, params))
    assert out.shape == (B, C_OUT, N)
    assert jnp.allclose(out, _reference(x, params), atol=1e-4, rtol=1e-4)

    # Exercise the tiled / pipelined path (grid (2, 3), tile_n = 128).
    B2, N2 = 2, 384
    x2 = jax.random.normal(kx2, (B2, 3, N2), jnp.float32)
    out2 = jax.block_until_ready(fwd(x2, params))
    assert jnp.allclose(out2, _reference(x2, params), atol=1e-4, rtol=1e-4)

    print("KERNEL_OK")
</pallas_src>

<mosaic_0001>
module attributes {stable_mosaic.version = 11 : i64} {
  func.func @_stats1_kernel(%arg0: i32, %arg1: i32, %arg2: memref<1x3x16xf32, #tpu.memory_space<vmem>>, %arg3: memref<64x3xf32, #tpu.memory_space<vmem>>, %arg4: memref<64x1xf32, #tpu.memory_space<vmem>>, %arg5: memref<64x1xf32, #tpu.memory_space<vmem>>) attributes {dimension_semantics = [#tpu.dimension_semantics<arbitrary>, #tpu.dimension_semantics<arbitrary>], iteration_bounds = array<i64: 2, 1>, scalar_prefetch = 0 : i64, scratch_operands = 0 : i64, tpu.core_type = #tpu.core_type<tc>, window_params = [{transform_indices = @transform_0, window_bounds = array<i64: 1, 3, 16>}, {pipeline_mode = #tpu.pipeline_mode<synchronous>, transform_indices = @transform_1, window_bounds = array<i64: 64, 3>}, {pipeline_mode = #tpu.pipeline_mode<synchronous>, transform_indices = @transform_2, window_bounds = array<i64: 64, 1>}, {pipeline_mode = #tpu.pipeline_mode<synchronous>, transform_indices = @transform_3, window_bounds = array<i64: 64, 1>}]} {
    %c0_i32 = arith.constant 0 : i32
    %0 = arith.cmpi eq, %arg0, %c0_i32 : i32
    %c0_i32_0 = arith.constant 0 : i32
    %1 = arith.cmpi eq, %arg1, %c0_i32_0 : i32
    %2 = arith.andi %0, %1 : i1
    %3 = arith.extui %2 : i1 to i32
    %c0_i32_1 = arith.constant 0 : i32
    %4 = arith.cmpi ne, %3, %c0_i32_1 : i32
    scf.if %4 {
      %cst_16 = arith.constant 0.000000e+00 : f32
      %20 = vector.broadcast %cst_16 : f32 to vector<64x1xf32>
      %c0_17 = arith.constant 0 : index
      %c0_18 = arith.constant 0 : index
      %21 = vector.load %arg4[%c0_17, %c0_18] : memref<64x1xf32, #tpu.memory_space<vmem>>, vector<64x1xf32>
      tpu.vector_store %arg4[%c0_17, %c0_18], %20 {strides = array<i32>} : memref<64x1xf32, #tpu.memory_space<vmem>>, vector<64x1xf32>,
      %cst_19 = arith.constant 0.000000e+00 : f32
      %22 = vector.broadcast %cst_19 : f32 to vector<64x1xf32>
      %c0_20 = arith.constant 0 : index
      %c0_21 = arith.constant 0 : index
      %23 = vector.load %arg5[%c0_20, %c0_21] : memref<64x1xf32, #tpu.memory_space<vmem>>, vector<64x1xf32>
      tpu.vector_store %arg5[%c0_20, %c0_21], %22 {strides = array<i32>} : memref<64x1xf32, #tpu.memory_space<vmem>>, vector<64x1xf32>,
    } else {
    }
    %c0 = arith.constant 0 : index
    %c0_2 = arith.constant 0 : index
    %5 = vector.load %arg3[%c0, %c0_2] : memref<64x3xf32, #tpu.memory_space<vmem>>, vector<64x3xf32>
    %c0_3 = arith.constant 0 : index
    %c0_4 = arith.constant 0 : index
    %c0_5 = arith.constant 0 : index
    %6 = vector.load %arg2[%c0_3, %c0_4, %c0_5] : memref<1x3x16xf32, #tpu.memory_space<vmem>>, vector<1x3x16xf32>
    %7 = vector.shape_cast %6 : vector<1x3x16xf32> to vector<3x16xf32>
    %cst = arith.constant dense<0.000000e+00> : vector<64x16xf32>
    %8 = tpu.matmul %5, %7, %cst {dimension_numbers = #tpu.dot_dimension_numbers<[1], [0], [0], [1], [0, 0, 1, 1], [], []>} : vector<64x3xf32>, vector<3x16xf32>, vector<64x16xf32> -> vector<64x16xf32>
    %c0_6 = arith.constant 0 : index
    %c0_7 = arith.constant 0 : index
    %9 = vector.load %arg4[%c0_6, %c0_7] : memref<64x1xf32, #tpu.memory_space<vmem>>, vector<64x1xf32>
    %cst_8 = arith.constant dense<0.000000e+00> : vector<64xf32>
    %10 = vector.multi_reduction <add>, %8, %cst_8 [1] : vector<64x16xf32> to vector<64xf32>
    %11 = vector.shape_cast %10 : vector<64xf32> to vector<64x1xf32>
    %12 = arith.addf %9, %11 : vector<64x1xf32>
    %c0_9 = arith.constant 0 : index
    %c0_10 = arith.constant 0 : index
    %13 = vector.load %arg4[%c0_9, %c0_10] : memref<64x1xf32, #tpu.memory_space<vmem>>, vector<64x1xf32>
    tpu.vector_store %arg4[%c0_9, %c0_10], %12 {strides = array<i32>} : memref<64x1xf32, #tpu.memory_space<vmem>>, vector<64x1xf32>,
    %c0_11 = arith.constant 0 : index
    %c0_12 = arith.constant 0 : index
    %14 = vector.load %arg5[%c0_11, %c0_12] : memref<64x1xf32, #tpu.memory_space<vmem>>, vector<64x1xf32>
    %15 = arith.mulf %8, %8 : vector<64x16xf32>
    %cst_13 = arith.constant dense<0.000000e+00> : vector<64xf32>
    %16 = vector.multi_reduction <add>, %15, %cst_13 [1] : vector<64x16xf32> to vector<64xf32>
    %17 = vector.shape_cast %16 : vector<64xf32> to vector<64x1xf32>
    %18 = arith.addf %14, %17 : vector<64x1xf32>
    %c0_14 = arith.constant 0 : index
    %c0_15 = arith.constant 0 : index
    %19 = vector.load %arg5[%c0_14, %c0_15] : memref<64x1xf32, #tpu.memory_space<vmem>>, vector<64x1xf32>
    tpu.vector_store %arg5[%c0_14, %c0_15], %18 {strides = array<i32>} : memref<64x1xf32, #tpu.memory_space<vmem>>, vector<64x1xf32>,
    return
  }
  func.func @transform_0(%arg0: i32, %arg1: i32) -> (i32, i32, i32) {
    %c0_i32 = arith.constant 0 : i32
    %c0_i32_0 = arith.constant 0 : i32
    return %arg0, %c0_i32, %arg1 : i32, i32, i32
  }
  func.func @transform_1(%arg0: i32, %arg1: i32) -> (i32, i32) {
    %c0_i32 = arith.constant 0 : i32
    %c0_i32_0 = arith.constant 0 : i32
    %c0_i32_1 = arith.constant 0 : i32
    return %c0_i32, %c0_i32_0 : i32, i32
  }
  func.func @transform_2(%arg0: i32, %arg1: i32) -> (i32, i32) {
    %c0_i32 = arith.constant 0 : i32
    %c0_i32_0 = arith.constant 0 : i32
    %c0_i32_1 = arith.constant 0 : i32
    return %c0_i32, %c0_i32_0 : i32, i32
  }
  func.func @transform_3(%arg0: i32, %arg1: i32) -> (i32, i32) {
    %c0_i32 = arith.constant 0 : i32
    %c0_i32_0 = arith.constant 0 : i32
    %c0_i32_1 = arith.constant 0 : i32
    return %c0_i32, %c0_i32_0 : i32, i32
  }
}

module attributes {stable_mosaic.version = 11 : i64} {
  func.func @_stats2_kernel(%arg0: i32, %arg1: i32, %arg2: memref<1x3x16xf32, #tpu.memory_space<vmem>>, %arg3: memref<64x3xf32, #tpu.memory_space<vmem>>, %arg4: memref<64x2xf32, #tpu.memory_space<vmem>>, %arg5: memref<64x64xf32, #tpu.memory_space<vmem>>, %arg6: memref<64x1xf32, #tpu.memory_space<vmem>>, %arg7: memref<64x1xf32, #tpu.memory_space<vmem>>) attributes {dimension_semantics = [#tpu.dimension_semantics<arbitrary>, #tpu.dimension_semantics<arbitrary>], iteration_bounds = array<i64: 2, 1>, scalar_prefetch = 0 : i64, scratch_operands = 0 : i64, tpu.core_type = #tpu.core_type<tc>, window_params = [{transform_indices = @transform_0, window_bounds = array<i64: 1, 3, 16>}, {pipeline_mode = #tpu.pipeline_mode<synchronous>, transform_indices = @transform_1, window_bounds = array<i64: 64, 3>}, {pipeline_mode = #tpu.pipeline_mode<synchronous>, transform_indices = @transform_2, window_bounds = array<i64: 64, 2>}, {pipeline_mode = #tpu.pipeline_mode<synchronous>, transform_indices = @transform_3, window_bounds = array<i64: 64, 64>}, {pipeline_mode = #tpu.pipeline_mode<synchronous>, transform_indices = @transform_4, window_bounds = array<i64: 64, 1>}, {pipeline_mode = #tpu.pipeline_mode<synchronous>, transform_indices = @transform_5, window_bounds = array<i64: 64, 1>}]} {
    %c0_i32 = arith.constant 0 : i32
    %0 = arith.cmpi eq, %arg0, %c0_i32 : i32
    %c0_i32_0 = arith.constant 0 : i32
    %1 = arith.cmpi eq, %arg1, %c0_i32_0 : i32
    %2 = arith.andi %0, %1 : i1
    %3 = arith.extui %2 : i1 to i32
    %c0_i32_1 = arith.constant 0 : i32
    %4 = arith.cmpi ne, %3, %c0_i32_1 : i32
    scf.if %4 {
      %cst_23 = arith.constant 0.000000e+00 : f32
      %30 = vector.broadcast %cst_23 : f32 to vector<64x1xf32>
      %c0_24 = arith.constant 0 : index
      %c0_25 = arith.constant 0 : index
      %31 = vector.load %arg6[%c0_24, %c0_25] : memref<64x1xf32, #tpu.memory_space<vmem>>, vector<64x1xf32>
      tpu.vector_store %arg6[%c0_24, %c0_25], %30 {strides = array<i32>} : memref<64x1xf32, #tpu.memory_space<vmem>>, vector<64x1xf32>,
      %cst_26 = arith.constant 0.000000e+00 : f32
      %32 = vector.broadcast %cst_26 : f32 to vector<64x1xf32>
      %c0_27 = arith.constant 0 : index
      %c0_28 = arith.constant 0 : index
      %33 = vector.load %arg7[%c0_27, %c0_28] : memref<64x1xf32, #tpu.memory_space<vmem>>, vector<64x1xf32>
      tpu.vector_store %arg7[%c0_27, %c0_28], %32 {strides = array<i32>} : memref<64x1xf32, #tpu.memory_space<vmem>>, vector<64x1xf32>,
    } else {
    }
    %c0 = arith.constant 0 : index
    %c0_2 = arith.constant 0 : index
    %5 = vector.load %arg3[%c0, %c0_2] : memref<64x3xf32, #tpu.memory_space<vmem>>, vector<64x3xf32>
    %c0_3 = arith.constant 0 : index
    %c0_4 = arith.constant 0 : index
    %c0_5 = arith.constant 0 : index
    %6 = vector.load %arg2[%c0_3, %c0_4, %c0_5] : memref<1x3x16xf32, #tpu.memory_space<vmem>>, vector<1x3x16xf32>
    %7 = vector.shape_cast %6 : vector<1x3x16xf32> to vector<3x16xf32>
    %cst = arith.constant dense<0.000000e+00> : vector<64x16xf32>
    %8 = tpu.matmul %5, %7, %cst {dimension_numbers = #tpu.dot_dimension_numbers<[1], [0], [0], [1], [0, 0, 1, 1], [], []>} : vector<64x3xf32>, vector<3x16xf32>, vector<64x16xf32> -> vector<64x16xf32>
    %c0_6 = arith.constant 0 : index
    %c0_7 = arith.constant 0 : index
    %9 = vector.load %arg4[%c0_6, %c0_7] : memref<64x2xf32, #tpu.memory_space<vmem>>, vector<64x1xf32>
    %10 = vector.broadcast %9 : vector<64x1xf32> to vector<64x16xf32>
    %11 = arith.mulf %8, %10 : vector<64x16xf32>
    %c0_8 = arith.constant 0 : index
    %c1 = arith.constant 1 : index
    %12 = vector.load %arg4[%c0_8, %c1] : memref<64x2xf32, #tpu.memory_space<vmem>>, vector<64x1xf32>
    %13 = vector.broadcast %12 : vector<64x1xf32> to vector<64x16xf32>
    %14 = arith.addf %11, %13 : vector<64x16xf32>
    %cst_9 = arith.constant 0.000000e+00 : f32
    %15 = vector.broadcast %cst_9 : f32 to vector<64x16xf32>
    %16 = arith.maximumf %14, %15 : vector<64x16xf32>
    %c0_10 = arith.constant 0 : index
    %c0_11 = arith.constant 0 : index
    %17 = vector.load %arg5[%c0_10, %c0_11] : memref<64x64xf32, #tpu.memory_space<vmem>>, vector<64x64xf32>
    %cst_12 = arith.constant dense<0.000000e+00> : vector<64x16xf32>
    %18 = tpu.matmul %17, %16, %cst_12 {dimension_numbers = #tpu.dot_dimension_numbers<[1], [0], [0], [1], [0, 0, 1, 1], [], []>} : vector<64x64xf32>, vector<64x16xf32>, vector<64x16xf32> -> vector<64x16xf32>
    %c0_13 = arith.constant 0 : index
    %c0_14 = arith.constant 0 : index
    %19 = vector.load %arg6[%c0_13, %c0_14] : memref<64x1xf32, #tpu.memory_space<vmem>>, vector<64x1xf32>
    %cst_15 = arith.constant dense<0.000000e+00> : vector<64xf32>
    %20 = vector.multi_reduction <add>, %18, %cst_15 [1] : vector<64x16xf32> to vector<64xf32>
    %21 = vector.shape_cast %20 : vector<64xf32> to vector<64x1xf32>
    %22 = arith.addf %19, %21 : vector<64x1xf32>
    %c0_16 = arith.constant 0 : index
    %c0_17 = arith.constant 0 : index
    %23 = vector.load %arg6[%c0_16, %c0_17] : memref<64x1xf32, #tpu.memory_space<vmem>>, vector<64x1xf32>
    tpu.vector_store %arg6[%c0_16, %c0_17], %22 {strides = array<i32>} : memref<64x1xf32, #tpu.memory_space<vmem>>, vector<64x1xf32>,
    %c0_18 = arith.constant 0 : index
    %c0_19 = arith.constant 0 : index
    %24 = vector.load %arg7[%c0_18, %c0_19] : memref<64x1xf32, #tpu.memory_space<vmem>>, vector<64x1xf32>
    %25 = arith.mulf %18, %18 : vector<64x16xf32>
    %cst_20 = arith.constant dense<0.000000e+00> : vector<64xf32>
    %26 = vector.multi_reduction <add>, %25, %cst_20 [1] : vector<64x16xf32> to vector<64xf32>
    %27 = vector.shape_cast %26 : vector<64xf32> to vector<64x1xf32>
    %28 = arith.addf %24, %27 : vector<64x1xf32>
    %c0_21 = arith.constant 0 : index
    %c0_22 = arith.constant 0 : index
    %29 = vector.load %arg7[%c0_21, %c0_22] : memref<64x1xf32, #tpu.memory_space<vmem>>, vector<64x1xf32>
    tpu.vector_store %arg7[%c0_21, %c0_22], %28 {strides = array<i32>} : memref<64x1xf32, #tpu.memory_space<vmem>>, vector<64x1xf32>,
    return
  }
  func.func @transform_0(%arg0: i32, %arg1: i32) -> (i32, i32, i32) {
    %c0_i32 = arith.constant 0 : i32
    %c0_i32_0 = arith.constant 0 : i32
    return %arg0, %c0_i32, %arg1 : i32, i32, i32
  }
  func.func @transform_1(%arg0: i32, %arg1: i32) -> (i32, i32) {
    %c0_i32 = arith.constant 0 : i32
    %c0_i32_0 = arith.constant 0 : i32
    %c0_i32_1 = arith.constant 0 : i32
    return %c0_i32, %c0_i32_0 : i32, i32
  }
  func.func @transform_2(%arg0: i32, %arg1: i32) -> (i32, i32) {
    %c0_i32 = arith.constant 0 : i32
    %c0_i32_0 = arith.constant 0 : i32
    %c0_i32_1 = arith.constant 0 : i32
    return %c0_i32, %c0_i32_0 : i32, i32
  }
  func.func @transform_3(%arg0: i32, %arg1: i32) -> (i32, i32) {
    %c0_i32 = arith.constant 0 : i32
    %c0_i32_0 = arith.constant 0 : i32
    %c0_i32_1 = arith.constant 0 : i32
    return %c0_i32, %c0_i32_0 : i32, i32
  }
  func.func @transform_4(%arg0: i32, %arg1: i32) -> (i32, i32) {
    %c0_i32 = arith.constant 0 : i32
    %c0_i32_0 = arith.constant 0 : i32
    %c0_i32_1 = arith.constant 0 : i32
    return %c0_i32, %c0_i32_0 : i32, i32
  }
  func.func @transform_5(%arg0: i32, %arg1: i32) -> (i32, i32) {
    %c0_i32 = arith.constant 0 : i32
    %c0_i32_0 = arith.constant 0 : i32
    %c0_i32_1 = arith.constant 0 : i32
    return %c0_i32, %c0_i32_0 : i32, i32
  }
}

module attributes {stable_mosaic.version = 11 : i64} {
  func.func @_apply_kernel(%arg0: i32, %arg1: i32, %arg2: memref<1x3x16xf32, #tpu.memory_space<vmem>>, %arg3: memref<64x3xf32, #tpu.memory_space<vmem>>, %arg4: memref<64x4xf32, #tpu.memory_space<vmem>>, %arg5: memref<64x64xf32, #tpu.memory_space<vmem>>, %arg6: memref<1x64x16xf32, #tpu.memory_space<vmem>>) attributes {dimension_semantics = [#tpu.dimension_semantics<parallel>, #tpu.dimension_semantics<parallel>], iteration_bounds = array<i64: 2, 1>, scalar_prefetch = 0 : i64, scratch_operands = 0 : i64, tpu.core_type = #tpu.core_type<tc>, window_params = [{transform_indices = @transform_0, window_bounds = array<i64: 1, 3, 16>}, {pipeline_mode = #tpu.pipeline_mode<synchronous>, transform_indices = @transform_1, window_bounds = array<i64: 64, 3>}, {pipeline_mode = #tpu.pipeline_mode<synchronous>, transform_indices = @transform_2, window_bounds = array<i64: 64, 4>}, {pipeline_mode = #tpu.pipeline_mode<synchronous>, transform_indices = @transform_3, window_bounds = array<i64: 64, 64>}, {transform_indices = @transform_4, window_bounds = array<i64: 1, 64, 16>}]} {
    %c0 = arith.constant 0 : index
    %c0_0 = arith.constant 0 : index
    %0 = vector.load %arg3[%c0, %c0_0] : memref<64x3xf32, #tpu.memory_space<vmem>>, vector<64x3xf32>
    %c0_1 = arith.constant 0 : index
    %c0_2 = arith.constant 0 : index
    %c0_3 = arith.constant 0 : index
    %1 = vector.load %arg2[%c0_1, %c0_2, %c0_3] : memref<1x3x16xf32, #tpu.memory_space<vmem>>, vector<1x3x16xf32>
    %2 = vector.shape_cast %1 : vector<1x3x16xf32> to vector<3x16xf32>
    %cst = arith.constant dense<0.000000e+00> : vector<64x16xf32>
    %3 = tpu.matmul %0, %2, %cst {dimension_numbers = #tpu.dot_dimension_numbers<[1], [0], [0], [1], [0, 0, 1, 1], [], []>} : vector<64x3xf32>, vector<3x16xf32>, vector<64x16xf32> -> vector<64x16xf32>
    %c0_4 = arith.constant 0 : index
    %c0_5 = arith.constant 0 : index
    %4 = vector.load %arg4[%c0_4, %c0_5] : memref<64x4xf32, #tpu.memory_space<vmem>>, vector<64x1xf32>
    %5 = vector.broadcast %4 : vector<64x1xf32> to vector<64x16xf32>
    %6 = arith.mulf %3, %5 : vector<64x16xf32>
    %c0_6 = arith.constant 0 : index
    %c1 = arith.constant 1 : index
    %7 = vector.load %arg4[%c0_6, %c1] : memref<64x4xf32, #tpu.memory_space<vmem>>, vector<64x1xf32>
    %8 = vector.broadcast %7 : vector<64x1xf32> to vector<64x16xf32>
    %9 = arith.addf %6, %8 : vector<64x16xf32>
    %cst_7 = arith.constant 0.000000e+00 : f32
    %10 = vector.broadcast %cst_7 : f32 to vector<64x16xf32>
    %11 = arith.maximumf %9, %10 : vector<64x16xf32>
    %c0_8 = arith.constant 0 : index
    %c0_9 = arith.constant 0 : index
    %12 = vector.load %arg5[%c0_8, %c0_9] : memref<64x64xf32, #tpu.memory_space<vmem>>, vector<64x64xf32>
    %cst_10 = arith.constant dense<0.000000e+00> : vector<64x16xf32>
    %13 = tpu.matmul %12, %11, %cst_10 {dimension_numbers = #tpu.dot_dimension_numbers<[1], [0], [0], [1], [0, 0, 1, 1], [], []>} : vector<64x64xf32>, vector<64x16xf32>, vector<64x16xf32> -> vector<64x16xf32>
    %c0_11 = arith.constant 0 : index
    %c2 = arith.constant 2 : index
    %14 = vector.load %arg4[%c0_11, %c2] : memref<64x4xf32, #tpu.memory_space<vmem>>, vector<64x1xf32>
    %15 = vector.broadcast %14 : vector<64x1xf32> to vector<64x16xf32>
    %16 = arith.mulf %13, %15 : vector<64x16xf32>
    %c0_12 = arith.constant 0 : index
    %c3 = arith.constant 3 : index
    %17 = vector.load %arg4[%c0_12, %c3] : memref<64x4xf32, #tpu.memory_space<vmem>>, vector<64x1xf32>
    %18 = vector.broadcast %17 : vector<64x1xf32> to vector<64x16xf32>
    %19 = arith.addf %16, %18 : vector<64x16xf32>
    %cst_13 = arith.constant 0.000000e+00 : f32
    %20 = vector.broadcast %cst_13 : f32 to vector<64x16xf32>
    %21 = arith.maximumf %19, %20 : vector<64x16xf32>
    %c0_14 = arith.constant 0 : index
    %c0_15 = arith.constant 0 : index
    %c0_16 = arith.constant 0 : index
    %22 = vector.load %arg6[%c0_14, %c0_15, %c0_16] : memref<1x64x16xf32, #tpu.memory_space<vmem>>, vector<1x64x16xf32>
    %23 = vector.shape_cast %22 : vector<1x64x16xf32> to vector<64x16xf32>
    %24 = vector.shape_cast %21 : vector<64x16xf32> to vector<1x64x16xf32>
    tpu.vector_store %arg6[%c0_14, %c0_15, %c0_16], %24 {strides = array<i32>} : memref<1x64x16xf32, #tpu.memory_space<vmem>>, vector<1x64x16xf32>,
    return
  }
  func.func @transform_0(%arg0: i32, %arg1: i32) -> (i32, i32, i32) {
    %c0_i32 = arith.constant 0 : i32
    %c0_i32_0 = arith.constant 0 : i32
    return %arg0, %c0_i32, %arg1 : i32, i32, i32
  }
  func.func @transform_1(%arg0: i32, %arg1: i32) -> (i32, i32) {
    %c0_i32 = arith.constant 0 : i32
    %c0_i32_0 = arith.constant 0 : i32
    %c0_i32_1 = arith.constant 0 : i32
    return %c0_i32, %c0_i32_0 : i32, i32
  }
  func.func @transform_2(%arg0: i32, %arg1: i32) -> (i32, i32) {
    %c0_i32 = arith.constant 0 : i32
    %c0_i32_0 = arith.constant 0 : i32
    %c0_i32_1 = arith.constant 0 : i32
    return %c0_i32, %c0_i32_0 : i32, i32
  }
  func.func @transform_3(%arg0: i32, %arg1: i32) -> (i32, i32) {
    %c0_i32 = arith.constant 0 : i32
    %c0_i32_0 = arith.constant 0 : i32
    %c0_i32_1 = arith.constant 0 : i32
    return %c0_i32, %c0_i32_0 : i32, i32
  }
  func.func @transform_4(%arg0: i32, %arg1: i32) -> (i32, i32, i32) {
    %c0_i32 = arith.constant 0 : i32
    %c0_i32_0 = arith.constant 0 : i32
    return %arg0, %c0_i32, %arg1 : i32, i32, i32
  }
}

</mosaic_0001>

<llo_original>
// kernel: s_mlp_1_forward.3
$region0: #{s_mlp_1_forward.3}
  #allocation0 [shape = 'u32[]', space=smem, size = 0x4, offset = 0x4, fixed_abs, tag = 'smem constant byte address 0x4 - core index']
  #allocation1 [shape = 'u32[144,128]{1,0:T(1,128)}', space=vmem, size = 0x12000, scoped, tag = 'internal scratch']
  %s0 = inlined_call_operand.vmem [shape: f32[2,3,16], index: 0, kind: input, shape index: {}]
  %s1 = inlined_call_operand.vmem [shape: f32[64,3], index: 1, kind: input, shape index: {}]
  %s2 = inlined_call_operand.vmem [shape: f32[64,1], index: 2, kind: output, shape index: {0}]
  %s3 = inlined_call_operand.vmem [shape: f32[64,1], index: 3, kind: output, shape index: {1}]
  %4 = xla_tuple %s2, %s3
  %s5 = sld [smem:[#allocation0]]
  $region53: #{s_mlp_1_forward.3} parent=0
    _
  %s7 = ssub.s32 1, %s5
  %s8 = scalar_select 0, %s7, %s5
  loop: start=0, step=1, limit=4
  $region2: #{s_mlp_1_forward.3} parent=0 // loop_pre_header
    _
  $region3: #{s_mlp_1_forward.3} parent=0 // loop_header
    %s10 = sphi 0, %s14
    %p11 = scmp.ge.s32.totalorder %s10, 4
    %s17 = sphi 0, %s29
    %s18 = sphi 0, %s25
    %s19 = sphi 0, %s17
    %s20 = sphi 0, %s18
    %s21 = sphi 0, %s19
    %s22 = sphi 0, %s20
    %s34 = sphi 0, %s36
    %s37 = sphi 0, %s34
    %s38 = sphi 0, %s37
    %s54 = sphi 0, %s38
    %s58 = sphi 0, %s58
    %s60 = sphi 0, %s58
    %s61 = sphi 0, %s60
    %s75 = sphi 0, %s61
    %s79 = sphi 0, %s79
    %s81 = sphi 0, %s79
    %s82 = sphi 0, %s81
    %s96 = sphi 0, %s82
    %s100 = sphi 0, %s100
    %s102 = sphi 0, %s100
    %s103 = sphi 0, %s102
    %s117 = sphi 0, %s103
  $region4: #{s_mlp_1_forward.3} parent=0 // loop_header_branch
    %13 = sbr.rel (%p11) target = $region8
  $region5: #{s_mlp_1_forward.3} parent=0 // loop_body
    %s15 = ssub.s32 %s10, 1
    %s16 = ssub.s32 %s10, 2
    %s23 = sadd.s32 1, %s18
    %p24 = scmp.ge.s32.totalorder %s23, 1
    %s25 = scalar_select %p24, 0, %s23
    %s26 = sadd.s32 1, %s17
    %s27 = scalar_select %p24, %s26, %s17
    %p28 = scmp.ge.s32.totalorder %s27, 2
    %s29 = scalar_select %p28, 0, %s27
    %s30 = ssub.s32 %s17, %s29
    %s31 = ssub.s32 %s18, %s25
    %s32 = sor.u32 %s30, %s31
    %p33 = scmp.eq.s32.totalorder %s32, 0
    %s35 = sadd.s32 %s34, 1
    %s36 = scalar_select %p33, %s34, %s35
    %p39 = pneg %p33
    %p40 = scmp.eq.s32.totalorder %s10, 1
    %p41 = por %p39, %p40
    %p42 = scmp.ne.s32.totalorder %s34, %s37
    %p43 = scmp.eq.s32.totalorder %s10, 0
    %p44 = por %p42, %p43
    %p45 = scmp.ne.s32.totalorder %s34, %s37
    %p46 = scmp.eq.s32.totalorder %s15, 1
    %p47 = por %p45, %p46
    %p48 = scmp.ne.s32.totalorder %s37, %s38
    %p49 = scmp.eq.s32.totalorder %s15, 0
    %p50 = por %p48, %p49
    %p51 = scmp.ne.s32.totalorder %s37, %s38
    %p52 = scmp.eq.s32.totalorder %s16, 1
    %p53 = por %p51, %p52
    %p55 = scmp.ne.s32.totalorder %s38, %s54
    %p56 = scmp.eq.s32.totalorder %s16, 0
    %p57 = por %p55, %p56
    %s59 = sadd.s32 %s58, 1
    %p62 = scmp.eq.s32.totalorder %s10, 1
    %p63 = scmp.ne.s32.totalorder %s58, %s60
    %p64 = scmp.eq.s32.totalorder %s10, 0
    %p65 = por %p63, %p64
    %p66 = scmp.ne.s32.totalorder %s58, %s60
    %p67 = scmp.eq.s32.totalorder %s15, 1
    %p68 = por %p66, %p67
    %p69 = scmp.ne.s32.totalorder %s60, %s61
    %p70 = scmp.eq.s32.totalorder %s15, 0
    %p71 = por %p69, %p70
    %p72 = scmp.ne.s32.totalorder %s60, %s61
    %p73 = scmp.eq.s32.totalorder %s16, 1
    %p74 = por %p72, %p73
    %p76 = scmp.ne.s32.totalorder %s61, %s75
    %p77 = scmp.eq.s32.totalorder %s16, 0
    %p78 = por %p76, %p77
    %s80 = sadd.s32 %s79, 1
    %p83 = scmp.eq.s32.totalorder %s10, 1
    %p84 = scmp.ne.s32.totalorder %s79, %s81
    %p85 = scmp.eq.s32.totalorder %s10, 0
    %p86 = por %p84, %p85
    %p87 = scmp.ne.s32.totalorder %s79, %s81
    %p88 = scmp.eq.s32.totalorder %s15, 1
    %p89 = por %p87, %p88
    %p90 = scmp.ne.s32.totalorder %s81, %s82
    %p91 = scmp.eq.s32.totalorder %s15, 0
    %p92 = por %p90, %p91
    %p93 = scmp.ne.s32.totalorder %s81, %s82
    %p94 = scmp.eq.s32.totalorder %s16, 1
    %p95 = por %p93, %p94
    %p97 = scmp.ne.s32.totalorder %s82, %s96
    %p98 = scmp.eq.s32.totalorder %s16, 0
    %p99 = por %p97, %p98
    %s101 = sadd.s32 %s100, 1
    %p104 = scmp.eq.s32.totalorder %s10, 1
    %p105 = scmp.ne.s32.totalorder %s100, %s102
    %p106 = scmp.eq.s32.totalorder %s10, 0
    %p107 = por %p105, %p106
    %p108 = scmp.ne.s32.totalorder %s100, %s102
    %p109 = scmp.eq.s32.totalorder %s15, 1
    %p110 = por %p108, %p109
    %p111 = scmp.ne.s32.totalorder %s102, %s103
    %p112 = scmp.eq.s32.totalorder %s15, 0
    %p113 = por %p111, %p112
    %p114 = scmp.ne.s32.totalorder %s102, %s103
    %p115 = scmp.eq.s32.totalorder %s16, 1
    %p116 = por %p114, %p115
    %p118 = scmp.ne.s32.totalorder %s103, %s117
    %p119 = scmp.eq.s32.totalorder %s16, 0
    %p120 = por %p118, %p119
    %p121 = scmp.le.s32.totalorder 1, %s10
    %p122 = scmp.lt.s32.totalorder %s10, 3
    %p123 = pnand %p121, %p122
    %p124 = pneg %p123
    // Predicated region
    $region9: #{s_mlp_1_forward.3} parent=5 // pred_check
      _
    $region10: #{s_mlp_1_forward.3} parent=5 // pred_check_branch
      %126 = sbr.rel (%p123) target = $region12
    $region11: #{s_mlp_1_forward.3} parent=5 // pred_region
      %s127 = ssub.s32 %s10, 1
      // Predicated region
      $region13: #{s_mlp_1_forward.3} parent=11 // pred_check
        %p128 = pneg %p71
      $region14: #{s_mlp_1_forward.3} parent=11 // pred_check_branch
        %130 = sbr.rel (%p128) target = $region16
      $region15: #{s_mlp_1_forward.3} parent=11 // pred_region
        _
      $region16: #{s_mlp_1_forward.3} parent=11 // pred_fallthru
        _
    $region12: #{s_mlp_1_forward.3} parent=5 // pred_fallthru
      _
    %p131 = scmp.lt.s32.totalorder %s10, 2
    // Predicated region
    $region17: #{s_mlp_1_forward.3} parent=5 // pred_check
      %p132 = pneg %p131
    $region18: #{s_mlp_1_forward.3} parent=5 // pred_check_branch
      %134 = sbr.rel (%p132) target = $region20
    $region19: #{s_mlp_1_forward.3} parent=5 // pred_region
      // Predicated region
      $region21: #{s_mlp_1_forward.3} parent=19 // pred_check
        %p135 = pneg %p44
      $region22: #{s_mlp_1_forward.3} parent=19 // pred_check_branch
        %137 = sbr.rel (%p135) target = $region24
      $region23: #{s_mlp_1_forward.3} parent=19 // pred_region
        %p138 = scmp.lt.s32.totalorder %s17, 1
        %s139 = scalar_select %p138, %s17, 1
        %p140 = scmp.lt.s32.totalorder %s18, 0
        %s141 = scalar_select %p140, %s18, 0
        %s142 = sadd.s32 %s141, %s139
        %s143 = smul.addr %s142, 4
        %s144 = scalar_lea.vmem %s0, %s143
      $region24: #{s_mlp_1_forward.3} parent=19 // pred_fallthru
        _
    $region20: #{s_mlp_1_forward.3} parent=5 // pred_fallthru
      _
    %p145 = scmp.le.s32.totalorder 1, %s10
    %p146 = scmp.lt.s32.totalorder %s10, 3
    %p147 = pnand %p145, %p146
    %p148 = pneg %p147
    // Predicated region
    $region25: #{s_mlp_1_forward.3} parent=5 // pred_check
      _
    $region26: #{s_mlp_1_forward.3} parent=5 // pred_check_branch
      %150 = sbr.rel (%p147) target = $region28
    $region27: #{s_mlp_1_forward.3} parent=5 // pred_region
      %s151 = ssub.s32 %s10, 1
      %p152 = scmp.lt.s32.totalorder %s19, 1
      %s153 = scalar_select %p152, %s19, 1
      %p154 = scmp.lt.s32.totalorder %s20, 0
      %s155 = scalar_select %p154, %s20, 0
      %s156 = sadd.s32 %s155, %s153
      %s157 = smul.addr %s156, 4
      %s158 = scalar_lea.vmem %s0, %s157
      %p159 = pneg %p50
      %p160 = pneg %p47
      %p161 = pneg %p71
      %p162 = pneg %p68
      %p163 = pneg %p92
      %p164 = pneg %p89
      %p165 = pneg %p113
      %p166 = pneg %p110
      %p167 = scmp.lt.s32.totalorder %s19, 1
      %s168 = scalar_select %p167, %s19, 1
      %p169 = scmp.lt.s32.totalorder %s20, 0
      %s170 = scalar_select %p169, %s20, 0
      %s171 = sadd.s32 %s170, %s168
      %s172 = smul.addr %s171, 4
      %s173 = scalar_lea.vmem %s0, %s172
      %p174 = scmp.eq.s32.totalorder %s19, 0
      %p175 = scmp.eq.s32.totalorder %s20, 0
      %p176 = pnand %p174, %p175
      %p177 = pneg %p176
      // Predicated region
      $region29: #{s_mlp_1_forward.3} parent=27 // pred_check
        _
      $region30: #{s_mlp_1_forward.3} parent=27 // pred_check_branch
        %179 = sbr.rel (%p176) target = $region32
      $region31: #{s_mlp_1_forward.3} parent=27 // pred_region
        %vm180 = vcmask 7168
        %181 = vst.msk [vmem:[%s2] sm:$0xff] %vm180, 0.0
        %182 = vst.msk [vmem:[%s2 + $0x8] sm:$0xff] %vm180, 0.0
        %183 = vst.msk [vmem:[%s2 + $0x10] sm:$0xff] %vm180, 0.0
        %184 = vst.msk [vmem:[%s2 + $0x18] sm:$0xff] %vm180, 0.0
        %185 = vst.msk [vmem:[%s2 + $0x20] sm:$0xff] %vm180, 0.0
        %186 = vst.msk [vmem:[%s2 + $0x28] sm:$0xff] %vm180, 0.0
        %187 = vst.msk [vmem:[%s2 + $0x30] sm:$0xff] %vm180, 0.0
        %188 = vst.msk [vmem:[%s2 + $0x38] sm:$0xff] %vm180, 0.0
        %189 = vst.msk [vmem:[%s3] sm:$0xff] %vm180, 0.0
        %190 = vst.msk [vmem:[%s3 + $0x8] sm:$0xff] %vm180, 0.0
        %191 = vst.msk [vmem:[%s3 + $0x10] sm:$0xff] %vm180, 0.0
        %192 = vst.msk [vmem:[%s3 + $0x18] sm:$0xff] %vm180, 0.0
        %193 = vst.msk [vmem:[%s3 + $0x20] sm:$0xff] %vm180, 0.0
        %194 = vst.msk [vmem:[%s3 + $0x28] sm:$0xff] %vm180, 0.0
        %195 = vst.msk [vmem:[%s3 + $0x30] sm:$0xff] %vm180, 0.0
        %196 = vst.msk [vmem:[%s3 + $0x38] sm:$0xff] %vm180, 0.0
      $region32: #{s_mlp_1_forward.3} parent=27 // pred_fallthru
        _
      %v197 = vld [vmem:[%s1] sm:$0xff]
      %v198 = vld [vmem:[%s1 + $0x8] sm:$0xff]
      %v199 = vld [vmem:[%s1 + $0x10] sm:$0xff]
      %v200 = vld [vmem:[%s1 + $0x18] sm:$0xff]
      %v201 = vld [vmem:[%s1 + $0x20] sm:$0xff]
      %v202 = vld [vmem:[%s1 + $0x28] sm:$0xff]
      %v203 = vld [vmem:[%s1 + $0x30] sm:$0xff]
      %v204 = vld [vmem:[%s1 + $0x38] sm:$0xff]
      %v205 = vld [vmem:[%s173] sm:$0x7]
      %vm206 = vcmask 23552
      %v208 = vsel %vm206, %v197, 0
      %v211 = vsel %vm206, %v198, 0
      %v214 = vsel %vm206, %v199, 0
      %v217 = vsel %vm206, %v200, 0
      %v220 = vsel %vm206, %v201, 0
      %v223 = vsel %vm206, %v202, 0
      %v226 = vsel %vm206, %v203, 0
      %v229 = vsel %vm206, %v204, 0
      %vm231 = vcmask 1042432
      %v233 = vsel %vm231, %v205, 0
      %235 = vmatprep.subr.mxu0 0.0
      %236 = vmatpush1.msra.mxu0 %v233
      %237 = vmatprep.subr.mxu0 0.0
      %238 = vmatpush1.msra.mxu0 0.0
      %239 = vmatprep.subr.mxu0 0.0
      %240 = vmatpush1.msra.mxu0 0.0
      %241 = vmatprep.subr.mxu0 0.0
      %242 = vmatpush1.msra.mxu0 0.0
      %243 = vmatprep.subr.mxu0 0.0
      %244 = vmatpush1.msra.mxu0 0.0
      %245 = vmatprep.subr.mxu0 0.0
      %246 = vmatpush1.msra.mxu0 0.0
      %247 = vmatprep.subr.mxu0 0.0
      %248 = vmatpush1.msra.mxu0 0.0
      %249 = vmatprep.subr.mxu0 0.0
      %250 = vmatpush1.msra.mxu0 0.0
      %251 = vmatprep.subr.mxu0 0.0
      %252 = vmatpush1.msra.mxu0 0.0
      %253 = vmatprep.subr.mxu0 0.0
      %254 = vmatpush1.msra.mxu0 0.0
      %255 = vmatprep.subr.mxu0 0.0
      %256 = vmatpush1.msra.mxu0 0.0
      %257 = vmatprep.subr.mxu0 0.0
      %258 = vmatpush1.msra.mxu0 0.0
      %259 = vmatprep.subr.mxu0 0.0
      %260 = vmatpush1.msra.mxu0 0.0
      %261 = vmatprep.subr.mxu0 0.0
      %262 = vmatpush1.msra.mxu0 0.0
      %263 = vmatprep.subr.mxu0 0.0
      %264 = vmatpush1.msra.mxu0 0.0
      %265 = vmatprep.subr.mxu0 0.0
      %266 = vmatpush1.msra.mxu0 0.0
      %267 = vmatprep.subr.mxu0 0.0
      %268 = vmatpush1.msra.mxu0 0.0
      %269 = vmatprep.subr.mxu0 0.0
      %270 = vmatpush1.msra.mxu0 0.0
      %271 = vmatprep.subr.mxu0 0.0
      %272 = vmatpush1.msra.mxu0 0.0
      %273 = vmatprep.subr.mxu0 0.0
      %274 = vmatpush1.msra.mxu0 0.0
      %275 = vmatprep.subr.mxu0 0.0
      %276 = vmatpush1.msra.mxu0 0.0
      %277 = vmatprep.subr.mxu0 0.0
      %278 = vmatpush1.msra.mxu0 0.0
      %279 = vmatprep.subr.mxu0 0.0
      %280 = vmatpush1.msra.mxu0 0.0
      %281 = vmatprep.subr.mxu0 0.0
      %282 = vmatpush1.msra.mxu0 0.0
      %283 = vmatprep.subr.mxu0 0.0
      %284 = vmatpush1.msra.mxu0 0.0
      %285 = vmatprep.subr.mxu0 0.0
      %286 = vmatpush1.msra.mxu0 0.0
      %287 = vmatprep.subr.mxu0 0.0
      %288 = vmatpush1.msra.mxu0 0.0
      %289 = vmatprep.subr.mxu0 0.0
      %290 = vmatpush1.msra.mxu0 0.0
      %291 = vmatprep.subr.mxu0 0.0
      %292 = vmatpush1.msra.mxu0 0.0
      %293 = vmatprep.subr.mxu0 0.0
      %294 = vmatpush1.msra.mxu0 0.0
      %295 = vmatprep.subr.mxu0 0.0
      %296 = vmatpush1.msra.mxu0 0.0
      %297 = vmatprep.subr.mxu0 0.0
      %298 = vmatpush1.msra.mxu0 0.0
      %299 = vmatprep.mubr.f32.mxu0 0.0
      %300 = vmatmul.mubr.f32.gmra.mrb[0].mxu0 %v208
      %v301 = vpop.f32.mrb[0].mxu0
      %v302 = vadd.f32 0.0, %v301
      %v303 = vpop.f32.mrb[0].mxu0
      %304 = vmatprep.mubr.f32.mxu0 0.0
      %305 = vmatmul.mubr.f32.gmra.mrb[0].mxu0 %v211
      %v306 = vpop.f32.mrb[0].mxu0
      %v307 = vadd.f32 0.0, %v306
      %v308 = vpop.f32.mrb[0].mxu0
      %309 = vmatprep.mubr.f32.mxu0 0.0
      %310 = vmatmul.mubr.f32.gmra.mrb[0].mxu0 %v214
      %v311 = vpop.f32.mrb[0].mxu0
      %v312 = vadd.f32 0.0, %v311
      %v313 = vpop.f32.mrb[0].mxu0
      %314 = vmatprep.mubr.f32.mxu0 0.0
      %315 = vmatmul.mubr.f32.gmra.mrb[0].mxu0 %v217
      %v316 = vpop.f32.mrb[0].mxu0
      %v317 = vadd.f32 0.0, %v316
      %v318 = vpop.f32.mrb[0].mxu0
      %319 = vmatprep.mubr.f32.mxu0 0.0
      %320 = vmatmul.mubr.f32.gmra.mrb[0].mxu0 %v220
      %v321 = vpop.f32.mrb[0].mxu0
      %v322 = vadd.f32 0.0, %v321
      %v323 = vpop.f32.mrb[0].mxu0
      %324 = vmatprep.mubr.f32.mxu0 0.0
      %325 = vmatmul.mubr.f32.gmra.mrb[0].mxu0 %v223
      %v326 = vpop.f32.mrb[0].mxu0
      %v327 = vadd.f32 0.0, %v326
      %v328 = vpop.f32.mrb[0].mxu0
      %329 = vmatprep.mubr.f32.mxu0 0.0
      %330 = vmatmul.mubr.f32.gmra.mrb[0].mxu0 %v226
      %v331 = vpop.f32.mrb[0].mxu0
      %v332 = vadd.f32 0.0, %v331
      %v333 = vpop.f32.mrb[0].mxu0
      %334 = vmatprep.mubr.f32.mxu0 0.0
      %335 = vmatmul.mubr.f32.gmra.mrb[0].mxu0 %v229
      %v336 = vpop.f32.mrb[0].mxu0
      %v337 = vadd.f32 0.0, %v336
      %v338 = vpop.f32.mrb[0].mxu0
      %339 = vdwg.mxu0
      %v340 = vld [vmem:[%s2] sm:$0xff]
      %v341 = vld [vmem:[%s2 + $0x8] sm:$0xff]
      %v342 = vld [vmem:[%s2 + $0x10] sm:$0xff]
      %v343 = vld [vmem:[%s2 + $0x18] sm:$0xff]
      %v344 = vld [vmem:[%s2 + $0x20] sm:$0xff]
      %v345 = vld [vmem:[%s2 + $0x28] sm:$0xff]
      %v346 = vld [vmem:[%s2 + $0x30] sm:$0xff]
      %v347 = vld [vmem:[%s2 + $0x38] sm:$0xff]
      %vm348 = vcmask 130048
      %v349 = vsel %vm348, %v302, 0.0
      %350 = vadd.xlane.f32.xlu0 %v349
      %v351 = vpop.xlane.xlu0 %350
      %v352 = vsel %vm348, %v307, 0.0
      %353 = vadd.xlane.f32.xlu0 %v352
      %v354 = vpop.xlane.xlu0 %353
      %v355 = vsel %vm348, %v312, 0.0
      %356 = vadd.xlane.f32.xlu0 %v355
      %v357 = vpop.xlane.xlu0 %356
      %v358 = vsel %vm348, %v317, 0.0
      %359 = vadd.xlane.f32.xlu0 %v358
      %v360 = vpop.xlane.xlu0 %359
      %v361 = vsel %vm348, %v322, 0.0
      %362 = vadd.xlane.f32.xlu0 %v361
      %v363 = vpop.xlane.xlu0 %362
      %v364 = vsel %vm348, %v327, 0.0
      %365 = vadd.xlane.f32.xlu0 %v364
      %v366 = vpop.xlane.xlu0 %365
      %v367 = vsel %vm348, %v332, 0.0
      %368 = vadd.xlane.f32.xlu0 %v367
      %v369 = vpop.xlane.xlu0 %368
      %v370 = vsel %vm348, %v337, 0.0
      %371 = vadd.xlane.f32.xlu0 %v370
      %v372 = vpop.xlane.xlu0 %371
      %v373 = vadd.f32 %v340, %v351
      %v374 = vadd.f32 %v341, %v354
      %v375 = vadd.f32 %v342, %v357
      %v376 = vadd.f32 %v343, %v360
      %v377 = vadd.f32 %v344, %v363
      %v378 = vadd.f32 %v345, %v366
      %v379 = vadd.f32 %v346, %v369
      %v380 = vadd.f32 %v347, %v372
      %vm381 = vcmask 7168
      %382 = vst.msk [vmem:[%s2] sm:$0xff] %vm381, %v373
      %383 = vst.msk [vmem:[%s2 + $0x8] sm:$0xff] %vm381, %v374
      %384 = vst.msk [vmem:[%s2 + $0x10] sm:$0xff] %vm381, %v375
      %385 = vst.msk [vmem:[%s2 + $0x18] sm:$0xff] %vm381, %v376
      %386 = vst.msk [vmem:[%s2 + $0x20] sm:$0xff] %vm381, %v377
      %387 = vst.msk [vmem:[%s2 + $0x28] sm:$0xff] %vm381, %v378
      %388 = vst.msk [vmem:[%s2 + $0x30] sm:$0xff] %vm381, %v379
      %389 = vst.msk [vmem:[%s2 + $0x38] sm:$0xff] %vm381, %v380
      %v390 = vld [vmem:[%s3] sm:$0xff]
      %v391 = vld [vmem:[%s3 + $0x8] sm:$0xff]
      %v392 = vld [vmem:[%s3 + $0x10] sm:$0xff]
      %v393 = vld [vmem:[%s3 + $0x18] sm:$0xff]
      %v394 = vld [vmem:[%s3 + $0x20] sm:$0xff]
      %v395 = vld [vmem:[%s3 + $0x28] sm:$0xff]
      %v396 = vld [vmem:[%s3 + $0x30] sm:$0xff]
      %v397 = vld [vmem:[%s3 + $0x38] sm:$0xff]
      %v398 = vmul.f32 %v302, %v302
      %v399 = vmul.f32 %v307, %v307
      %v400 = vmul.f32 %v312, %v312
      %v401 = vmul.f32 %v317, %v317
      %v402 = vmul.f32 %v322, %v322
      %v403 = vmul.f32 %v327, %v327
      %v404 = vmul.f32 %v332, %v332
      %v405 = vmul.f32 %v337, %v337
      %v406 = vsel %vm348, %v398, 0.0
      %407 = vadd.xlane.f32.xlu0 %v406
      %v408 = vpop.xlane.xlu0 %407
      %v409 = vsel %vm348, %v399, 0.0
      %410 = vadd.xlane.f32.xlu0 %v409
      %v411 = vpop.xlane.xlu0 %410
      %v412 = vsel %vm348, %v400, 0.0
      %413 = vadd.xlane.f32.xlu0 %v412
      %v414 = vpop.xlane.xlu0 %413
      %v415 = vsel %vm348, %v401, 0.0
      %416 = vadd.xlane.f32.xlu0 %v415
      %v417 = vpop.xlane.xlu0 %416
      %v418 = vsel %vm348, %v402, 0.0
      %419 = vadd.xlane.f32.xlu0 %v418
      %v420 = vpop.xlane.xlu0 %419
      %v421 = vsel %vm348, %v403, 0.0
      %422 = vadd.xlane.f32.xlu0 %v421
      %v423 = vpop.xlane.xlu0 %422
      %v424 = vsel %vm348, %v404, 0.0
      %425 = vadd.xlane.f32.xlu0 %v424
      %v426 = vpop.xlane.xlu0 %425
      %v427 = vsel %vm348, %v405, 0.0
      %428 = vadd.xlane.f32.xlu0 %v427
      %v429 = vpop.xlane.xlu0 %428
      %v430 = vadd.f32 %v390, %v408
      %v431 = vadd.f32 %v391, %v411
      %v432 = vadd.f32 %v392, %v414
      %v433 = vadd.f32 %v393, %v417
      %v434 = vadd.f32 %v394, %v420
      %v435 = vadd.f32 %v395, %v423
      %v436 = vadd.f32 %v396, %v426
      %v437 = vadd.f32 %v397, %v429
      %438 = vst.msk [vmem:[%s3] sm:$0xff] %vm381, %v430
      %439 = vst.msk [vmem:[%s3 + $0x8] sm:$0xff] %vm381, %v431
      %440 = vst.msk [vmem:[%s3 + $0x10] sm:$0xff] %vm381, %v432
      %441 = vst.msk [vmem:[%s3 + $0x18] sm:$0xff] %vm381, %v433
      %442 = vst.msk [vmem:[%s3 + $0x20] sm:$0xff] %vm381, %v434
      %443 = vst.msk [vmem:[%s3 + $0x28] sm:$0xff] %vm381, %v435
      %444 = vst.msk [vmem:[%s3 + $0x30] sm:$0xff] %vm381, %v436
      %445 = vst.msk [vmem:[%s3 + $0x38] sm:$0xff] %vm381, %v437
      // Predicated region
      $region33: #{s_mlp_1_forward.3} parent=27 // pred_check
        %p446 = pneg %p89
      $region34: #{s_mlp_1_forward.3} parent=27 // pred_check_branch
        %448 = sbr.rel (%p446) target = $region36
      $region35: #{s_mlp_1_forward.3} parent=27 // pred_region
        _
      $region36: #{s_mlp_1_forward.3} parent=27 // pred_fallthru
        _
      // Predicated region
      $region37: #{s_mlp_1_forward.3} parent=27 // pred_check
        %p449 = pneg %p110
      $region38: #{s_mlp_1_forward.3} parent=27 // pred_check_branch
        %451 = sbr.rel (%p449) target = $region40
      $region39: #{s_mlp_1_forward.3} parent=27 // pred_region
        _
      $region40: #{s_mlp_1_forward.3} parent=27 // pred_fallthru
        _
      // Predicated region
      $region41: #{s_mlp_1_forward.3} parent=27 // pred_check
        %p452 = pneg %p89
      $region42: #{s_mlp_1_forward.3} parent=27 // pred_check_branch
        %454 = sbr.rel (%p452) target = $region44
      $region43: #{s_mlp_1_forward.3} parent=27 // pred_region
        _
      $region44: #{s_mlp_1_forward.3} parent=27 // pred_fallthru
        _
      // Predicated region
      $region45: #{s_mlp_1_forward.3} parent=27 // pred_check
        %p455 = pneg %p110
      $region46: #{s_mlp_1_forward.3} parent=27 // pred_check_branch
        %457 = sbr.rel (%p455) target = $region48
      $region47: #{s_mlp_1_forward.3} parent=27 // pred_region
        _
      $region48: #{s_mlp_1_forward.3} parent=27 // pred_fallthru
        _
    $region28: #{s_mlp_1_forward.3} parent=5 // pred_fallthru
      _
    %p458 = scmp.le.s32.totalorder 2, %s10
    // Predicated region
    $region49: #{s_mlp_1_forward.3} parent=5 // pred_check
      %p459 = pneg %p458
    $region50: #{s_mlp_1_forward.3} parent=5 // pred_check_branch
      %461 = sbr.rel (%p459) target = $region52
    $region51: #{s_mlp_1_forward.3} parent=5 // pred_region
      %s462 = ssub.s32 %s10, 2
    $region52: #{s_mlp_1_forward.3} parent=5 // pred_fallthru
      _
  $region6: #{s_mlp_1_forward.3} parent=0 // loop_footer
    %s14 = sadd.s32 1, %s10
  $region7: #{s_mlp_1_forward.3} parent=0 // loop_footer_branch
    %9 = sbr.rel target = $region3
  $region8: #{s_mlp_1_forward.3} parent=0 // loop_exit
    _

// kernel: s_mlp_1_forward.4
$region0: #{s_mlp_1_forward.4}
  #allocation0 [shape = 'u32[]', space=smem, size = 0x4, offset = 0x4, fixed_abs, tag = 'smem constant byte address 0x4 - core index']
  #allocation1 [shape = 'u32[144,128]{1,0:T(1,128)}', space=vmem, size = 0x12000, scoped, tag = 'internal scratch']
  %s0 = inlined_call_operand.vmem [shape: f32[2,3,16], index: 0, kind: input, shape index: {}]
  %s1 = inlined_call_operand.vmem [shape: f32[64,3], index: 1, kind: input, shape index: {}]
  %s2 = inlined_call_operand.vmem [shape: f32[64,2], index: 2, kind: input, shape index: {}]
  %s3 = inlined_call_operand.vmem [shape: f32[64,64], index: 3, kind: input, shape index: {}]
  %s4 = inlined_call_operand.vmem [shape: f32[64,1], index: 4, kind: output, shape index: {0}]
  %s5 = inlined_call_operand.vmem [shape: f32[64,1], index: 5, kind: output, shape index: {1}]
  %6 = xla_tuple %s4, %s5
  %s7 = sld [smem:[#allocation0]]
  $region61: #{s_mlp_1_forward.4} parent=0
    _
  %s9 = ssub.s32 1, %s7
  %s10 = scalar_select 0, %s9, %s7
  loop: start=0, step=1, limit=4
  $region2: #{s_mlp_1_forward.4} parent=0 // loop_pre_header
    _
  $region3: #{s_mlp_1_forward.4} parent=0 // loop_header
    %s12 = sphi 0, %s16
    %p13 = scmp.ge.s32.totalorder %s12, 4
    %s19 = sphi 0, %s31
    %s20 = sphi 0, %s27
    %s21 = sphi 0, %s19
    %s22 = sphi 0, %s20
    %s23 = sphi 0, %s21
    %s24 = sphi 0, %s22
    %s36 = sphi 0, %s38
    %s39 = sphi 0, %s36
    %s40 = sphi 0, %s39
    %s56 = sphi 0, %s40
    %s60 = sphi 0, %s60
    %s62 = sphi 0, %s60
    %s63 = sphi 0, %s62
    %s77 = sphi 0, %s63
    %s81 = sphi 0, %s81
    %s83 = sphi 0, %s81
    %s84 = sphi 0, %s83
    %s98 = sphi 0, %s84
    %s102 = sphi 0, %s102
    %s104 = sphi 0, %s102
    %s105 = sphi 0, %s104
    %s119 = sphi 0, %s105
    %s123 = sphi 0, %s123
    %s125 = sphi 0, %s123
    %s126 = sphi 0, %s125
    %s140 = sphi 0, %s126
    %s144 = sphi 0, %s144
    %s146 = sphi 0, %s144
    %s147 = sphi 0, %s146
    %s161 = sphi 0, %s147
  $region4: #{s_mlp_1_forward.4} parent=0 // loop_header_branch
    %15 = sbr.rel (%p13) target = $region8
  $region5: #{s_mlp_1_forward.4} parent=0 // loop_body
    %s17 = ssub.s32 %s12, 1
    %s18 = ssub.s32 %s12, 2
    %s25 = sadd.s32 1, %s20
    %p26 = scmp.ge.s32.totalorder %s25, 1
    %s27 = scalar_select %p26, 0, %s25
    %s28 = sadd.s32 1, %s19
    %s29 = scalar_select %p26, %s28, %s19
    %p30 = scmp.ge.s32.totalorder %s29, 2
    %s31 = scalar_select %p30, 0, %s29
    %s32 = ssub.s32 %s19, %s31
    %s33 = ssub.s32 %s20, %s27
    %s34 = sor.u32 %s32, %s33
    %p35 = scmp.eq.s32.totalorder %s34, 0
    %s37 = sadd.s32 %s36, 1
    %s38 = scalar_select %p35, %s36, %s37
    %p41 = pneg %p35
    %p42 = scmp.eq.s32.totalorder %s12, 1
    %p43 = por %p41, %p42
    %p44 = scmp.ne.s32.totalorder %s36, %s39
    %p45 = scmp.eq.s32.totalorder %s12, 0
    %p46 = por %p44, %p45
    %p47 = scmp.ne.s32.totalorder %s36, %s39
    %p48 = scmp.eq.s32.totalorder %s17, 1
    %p49 = por %p47, %p48
    %p50 = scmp.ne.s32.totalorder %s39, %s40
    %p51 = scmp.eq.s32.totalorder %s17, 0
    %p52 = por %p50, %p51
    %p53 = scmp.ne.s32.totalorder %s39, %s40
    %p54 = scmp.eq.s32.totalorder %s18, 1
    %p55 = por %p53, %p54
    %p57 = scmp.ne.s32.totalorder %s40, %s56
    %p58 = scmp.eq.s32.totalorder %s18, 0
    %p59 = por %p57, %p58
    %s61 = sadd.s32 %s60, 1
    %p64 = scmp.eq.s32.totalorder %s12, 1
    %p65 = scmp.ne.s32.totalorder %s60, %s62
    %p66 = scmp.eq.s32.totalorder %s12, 0
    %p67 = por %p65, %p66
    %p68 = scmp.ne.s32.totalorder %s60, %s62
    %p69 = scmp.eq.s32.totalorder %s17, 1
    %p70 = por %p68, %p69
    %p71 = scmp.ne.s32.totalorder %s62, %s63
    %p72 = scmp.eq.s32.totalorder %s17, 0
    %p73 = por %p71, %p72
    %p74 = scmp.ne.s32.totalorder %s62, %s63
    %p75 = scmp.eq.s32.totalorder %s18, 1
    %p76 = por %p74, %p75
    %p78 = scmp.ne.s32.totalorder %s63, %s77
    %p79 = scmp.eq.s32.totalorder %s18, 0
    %p80 = por %p78, %p79
    %s82 = sadd.s32 %s81, 1
    %p85 = scmp.eq.s32.totalorder %s12, 1
    %p86 = scmp.ne.s32.totalorder %s81, %s83
    %p87 = scmp.eq.s32.totalorder %s12, 0
    %p88 = por %p86, %p87
    %p89 = scmp.ne.s32.totalorder %s81, %s83
    %p90 = scmp.eq.s32.totalorder %s17, 1
    %p91 = por %p89, %p90
    %p92 = scmp.ne.s32.totalorder %s83, %s84
    %p93 = scmp.eq.s32.totalorder %s17, 0
    %p94 = por %p92, %p93
    %p95 = scmp.ne.s32.totalorder %s83, %s84
    %p96 = scmp.eq.s32.totalorder %s18, 1
    %p97 = por %p95, %p96
    %p99 = scmp.ne.s32.totalorder %s84, %s98
    %p100 = scmp.eq.s32.totalorder %s18, 0
    %p101 = por %p99, %p100
    %s103 = sadd.s32 %s102, 1
    %p106 = scmp.eq.s32.totalorder %s12, 1
    %p107 = scmp.ne.s32.totalorder %s102, %s104
    %p108 = scmp.eq.s32.totalorder %s12, 0
    %p109 = por %p107, %p108
    %p110 = scmp.ne.s32.totalorder %s102, %s104
    %p111 = scmp.eq.s32.totalorder %s17, 1
    %p112 = por %p110, %p111
    %p113 = scmp.ne.s32.totalorder %s104, %s105
    %p114 = scmp.eq.s32.totalorder %s17, 0
    %p115 = por %p113, %p114
    %p116 = scmp.ne.s32.totalorder %s104, %s105
    %p117 = scmp.eq.s32.totalorder %s18, 1
    %p118 = por %p116, %p117
    %p120 = scmp.ne.s32.totalorder %s105, %s119
    %p121 = scmp.eq.s32.totalorder %s18, 0
    %p122 = por %p120, %p121
    %s124 = sadd.s32 %s123, 1
    %p127 = scmp.eq.s32.totalorder %s12, 1
    %p128 = scmp.ne.s32.totalorder %s123, %s125
    %p129 = scmp.eq.s32.totalorder %s12, 0
    %p130 = por %p128, %p129
    %p131 = scmp.ne.s32.totalorder %s123, %s125
    %p132 = scmp.eq.s32.totalorder %s17, 1
    %p133 = por %p131, %p132
    %p134 = scmp.ne.s32.totalorder %s125, %s126
    %p135 = scmp.eq.s32.totalorder %s17, 0
    %p136 = por %p134, %p135
    %p137 = scmp.ne.s32.totalorder %s125, %s126
    %p138 = scmp.eq.s32.totalorder %s18, 1
    %p139 = por %p137, %p138
    %p141 = scmp.ne.s32.totalorder %s126, %s140
    %p142 = scmp.eq.s32.totalorder %s18, 0
    %p143 = por %p141, %p142
    %s145 = sadd.s32 %s144, 1
    %p148 = scmp.eq.s32.totalorder %s12, 1
    %p149 = scmp.ne.s32.totalorder %s144, %s146
    %p150 = scmp.eq.s32.totalorder %s12, 0
    %p151 = por %p149, %p150
    %p152 = scmp.ne.s32.totalorder %s144, %s146
    %p153 = scmp.eq.s32.totalorder %s17, 1
    %p154 = por %p152, %p153
    %p155 = scmp.ne.s32.totalorder %s146, %s147
    %p156 = scmp.eq.s32.totalorder %s17, 0
    %p157 = por %p155, %p156
    %p158 = scmp.ne.s32.totalorder %s146, %s147
    %p159 = scmp.eq.s32.totalorder %s18, 1
    %p160 = por %p158, %p159
    %p162 = scmp.ne.s32.totalorder %s147, %s161
    %p163 = scmp.eq.s32.totalorder %s18, 0
    %p164 = por %p162, %p163
    %p165 = scmp.le.s32.totalorder 1, %s12
    %p166 = scmp.lt.s32.totalorder %s12, 3
    %p167 = pnand %p165, %p166
    %p168 = pneg %p167
    // Predicated region
    $region9: #{s_mlp_1_forward.4} parent=5 // pred_check
      _
    $region10: #{s_mlp_1_forward.4} parent=5 // pred_check_branch
      %170 = sbr.rel (%p167) target = $region12
    $region11: #{s_mlp_1_forward.4} parent=5 // pred_region
      %s171 = ssub.s32 %s12, 1
      // Predicated region
      $region13: #{s_mlp_1_forward.4} parent=11 // pred_check
        %p172 = pneg %p73
      $region14: #{s_mlp_1_forward.4} parent=11 // pred_check_branch
        %174 = sbr.rel (%p172) target = $region16
      $region15: #{s_mlp_1_forward.4} parent=11 // pred_region
        _
      $region16: #{s_mlp_1_forward.4} parent=11 // pred_fallthru
        _
      // Predicated region
      $region17: #{s_mlp_1_forward.4} parent=11 // pred_check
        %p175 = pneg %p94
      $region18: #{s_mlp_1_forward.4} parent=11 // pred_check_branch
        %177 = sbr.rel (%p175) target = $region20
      $region19: #{s_mlp_1_forward.4} parent=11 // pred_region
        _
      $region20: #{s_mlp_1_forward.4} parent=11 // pred_fallthru
        _
      // Predicated region
      $region21: #{s_mlp_1_forward.4} parent=11 // pred_check
        %p178 = pneg %p115
      $region22: #{s_mlp_1_forward.4} parent=11 // pred_check_branch
        %180 = sbr.rel (%p178) target = $region24
      $region23: #{s_mlp_1_forward.4} parent=11 // pred_region
        _
      $region24: #{s_mlp_1_forward.4} parent=11 // pred_fallthru
        _
    $region12: #{s_mlp_1_forward.4} parent=5 // pred_fallthru
      _
    %p181 = scmp.lt.s32.totalorder %s12, 2
    // Predicated region
    $region25: #{s_mlp_1_forward.4} parent=5 // pred_check
      %p182 = pneg %p181
    $region26: #{s_mlp_1_forward.4} parent=5 // pred_check_branch
      %184 = sbr.rel (%p182) target = $region28
    $region27: #{s_mlp_1_forward.4} parent=5 // pred_region
      // Predicated region
      $region29: #{s_mlp_1_forward.4} parent=27 // pred_check
        %p185 = pneg %p46
      $region30: #{s_mlp_1_forward.4} parent=27 // pred_check_branch
        %187 = sbr.rel (%p185) target = $region32
      $region31: #{s_mlp_1_forward.4} parent=27 // pred_region
        %p188 = scmp.lt.s32.totalorder %s19, 1
        %s189 = scalar_select %p188, %s19, 1
        %p190 = scmp.lt.s32.totalorder %s20, 0
        %s191 = scalar_select %p190, %s20, 0
        %s192 = sadd.s32 %s191, %s189
        %s193 = smul.addr %s192, 4
        %s194 = scalar_lea.vmem %s0, %s193
      $region32: #{s_mlp_1_forward.4} parent=27 // pred_fallthru
        _
    $region28: #{s_mlp_1_forward.4} parent=5 // pred_fallthru
      _
    %p195 = scmp.le.s32.totalorder 1, %s12
    %p196 = scmp.lt.s32.totalorder %s12, 3
    %p197 = pnand %p195, %p196
    %p198 = pneg %p197
    // Predicated region
    $region33: #{s_mlp_1_forward.4} parent=5 // pred_check
      _
    $region34: #{s_mlp_1_forward.4} parent=5 // pred_check_branch
      %200 = sbr.rel (%p197) target = $region36
    $region35: #{s_mlp_1_forward.4} parent=5 // pred_region
      %s201 = ssub.s32 %s12, 1
      %p202 = scmp.lt.s32.totalorder %s21, 1
      %s203 = scalar_select %p202, %s21, 1
      %p204 = scmp.lt.s32.totalorder %s22, 0
      %s205 = scalar_select %p204, %s22, 0
      %s206 = sadd.s32 %s205, %s203
      %s207 = smul.addr %s206, 4
      %s208 = scalar_lea.vmem %s0, %s207
      %p209 = pneg %p52
      %p210 = pneg %p49
      %p211 = pneg %p73
      %p212 = pneg %p70
      %p213 = pneg %p94
      %p214 = pneg %p91
      %p215 = pneg %p115
      %p216 = pneg %p112
      %p217 = pneg %p136
      %p218 = pneg %p133
      %p219 = pneg %p157
      %p220 = pneg %p154
      %p221 = scmp.lt.s32.totalorder %s21, 1
      %s222 = scalar_select %p221, %s21, 1
      %p223 = scmp.lt.s32.totalorder %s22, 0
      %s224 = scalar_select %p223, %s22, 0
      %s225 = sadd.s32 %s224, %s222
      %s226 = smul.addr %s225, 4
      %s227 = scalar_lea.vmem %s0, %s226
      %p228 = scmp.eq.s32.totalorder %s21, 0
      %p229 = scmp.eq.s32.totalorder %s22, 0
      %p230 = pnand %p228, %p229
      %p231 = pneg %p230
      // Predicated region
      $region37: #{s_mlp_1_forward.4} parent=35 // pred_check
        _
      $region38: #{s_mlp_1_forward.4} parent=35 // pred_check_branch
        %233 = sbr.rel (%p230) target = $region40
      $region39: #{s_mlp_1_forward.4} parent=35 // pred_region
        %vm234 = vcmask 7168
        %235 = vst.msk [vmem:[%s4] sm:$0xff] %vm234, 0.0
        %236 = vst.msk [vmem:[%s4 + $0x8] sm:$0xff] %vm234, 0.0
        %237 = vst.msk [vmem:[%s4 + $0x10] sm:$0xff] %vm234, 0.0
        %238 = vst.msk [vmem:[%s4 + $0x18] sm:$0xff] %vm234, 0.0
        %239 = vst.msk [vmem:[%s4 + $0x20] sm:$0xff] %vm234, 0.0
        %240 = vst.msk [vmem:[%s4 + $0x28] sm:$0xff] %vm234, 0.0
        %241 = vst.msk [vmem:[%s4 + $0x30] sm:$0xff] %vm234, 0.0
        %242 = vst.msk [vmem:[%s4 + $0x38] sm:$0xff] %vm234, 0.0
        %243 = vst.msk [vmem:[%s5] sm:$0xff] %vm234, 0.0
        %244 = vst.msk [vmem:[%s5 + $0x8] sm:$0xff] %vm234, 0.0
        %245 = vst.msk [vmem:[%s5 + $0x10] sm:$0xff] %vm234, 0.0
        %246 = vst.msk [vmem:[%s5 + $0x18] sm:$0xff] %vm234, 0.0
        %247 = vst.msk [vmem:[%s5 + $0x20] sm:$0xff] %vm234, 0.0
        %248 = vst.msk [vmem:[%s5 + $0x28] sm:$0xff] %vm234, 0.0
        %249 = vst.msk [vmem:[%s5 + $0x30] sm:$0xff] %vm234, 0.0
        %250 = vst.msk [vmem:[%s5 + $0x38] sm:$0xff] %vm234, 0.0
      $region40: #{s_mlp_1_forward.4} parent=35 // pred_fallthru
        _
      %v251 = vld [vmem:[%s1] sm:$0xff]
      %v252 = vld [vmem:[%s1 + $0x8] sm:$0xff]
      %v253 = vld [vmem:[%s1 + $0x10] sm:$0xff]
      %v254 = vld [vmem:[%s1 + $0x18] sm:$0xff]
      %v255 = vld [vmem:[%s1 + $0x20] sm:$0xff]
      %v256 = vld [vmem:[%s1 + $0x28] sm:$0xff]
      %v257 = vld [vmem:[%s1 + $0x30] sm:$0xff]
      %v258 = vld [vmem:[%s1 + $0x38] sm:$0xff]
      %v259 = vld [vmem:[%s227] sm:$0x7]
      %vm260 = vcmask 23552
      %v262 = vsel %vm260, %v251, 0
      %v265 = vsel %vm260, %v252, 0
      %v268 = vsel %vm260, %v253, 0
      %v271 = vsel %vm260, %v254, 0
      %v274 = vsel %vm260, %v255, 0
      %v277 = vsel %vm260, %v256, 0
      %v280 = vsel %vm260, %v257, 0
      %v283 = vsel %vm260, %v258, 0
      %vm285 = vcmask 1042432
      %v287 = vsel %vm285, %v259, 0
      %289 = vmatprep.subr.mxu0 0.0
      %290 = vmatpush1.msra.mxu0 %v287
      %291 = vmatprep.subr.mxu0 0.0
      %292 = vmatpush1.msra.mxu0 0.0
      %293 = vmatprep.subr.mxu0 0.0
      %294 = vmatpush1.msra.mxu0 0.0
      %295 = vmatprep.subr.mxu0 0.0
      %296 = vmatpush1.msra.mxu0 0.0
      %297 = vmatprep.subr.mxu0 0.0
      %298 = vmatpush1.msra.mxu0 0.0
      %299 = vmatprep.subr.mxu0 0.0
      %300 = vmatpush1.msra.mxu0 0.0
      %301 = vmatprep.subr.mxu0 0.0
      %302 = vmatpush1.msra.mxu0 0.0
      %303 = vmatprep.subr.mxu0 0.0
      %304 = vmatpush1.msra.mxu0 0.0
      %305 = vmatprep.subr.mxu0 0.0
      %306 = vmatpush1.msra.mxu0 0.0
      %307 = vmatprep.subr.mxu0 0.0
      %308 = vmatpush1.msra.mxu0 0.0
      %309 = vmatprep.subr.mxu0 0.0
      %310 = vmatpush1.msra.mxu0 0.0
      %311 = vmatprep.subr.mxu0 0.0
      %312 = vmatpush1.msra.mxu0 0.0
      %313 = vmatprep.subr.mxu0 0.0
      %314 = vmatpush1.msra.mxu0 0.0
      %315 = vmatprep.subr.mxu0 0.0
      %316 = vmatpush1.msra.mxu0 0.0
      %317 = vmatprep.subr.mxu0 0.0
      %318 = vmatpush1.msra.mxu0 0.0
      %319 = vmatprep.subr.mxu0 0.0
      %320 = vmatpush1.msra.mxu0 0.0
      %321 = vmatprep.subr.mxu0 0.0
      %322 = vmatpush1.msra.mxu0 0.0
      %323 = vmatprep.subr.mxu0 0.0
      %324 = vmatpush1.msra.mxu0 0.0
      %325 = vmatprep.subr.mxu0 0.0
      %326 = vmatpush1.msra.mxu0 0.0
      %327 = vmatprep.subr.mxu0 0.0
      %328 = vmatpush1.msra.mxu0 0.0
      %329 = vmatprep.subr.mxu0 0.0
      %330 = vmatpush1.msra.mxu0 0.0
      %331 = vmatprep.subr.mxu0 0.0
      %332 = vmatpush1.msra.mxu0 0.0
      %333 = vmatprep.subr.mxu0 0.0
      %334 = vmatpush1.msra.mxu0 0.0
      %335 = vmatprep.subr.mxu0 0.0
      %336 = vmatpush1.msra.mxu0 0.0
      %337 = vmatprep.subr.mxu0 0.0
      %338 = vmatpush1.msra.mxu0 0.0
      %339 = vmatprep.subr.mxu0 0.0
      %340 = vmatpush1.msra.mxu0 0.0
      %341 = vmatprep.subr.mxu0 0.0
      %342 = vmatpush1.msra.mxu0 0.0
      %343 = vmatprep.subr.mxu0 0.0
      %344 = vmatpush1.msra.mxu0 0.0
      %345 = vmatprep.subr.mxu0 0.0
      %346 = vmatpush1.msra.mxu0 0.0
      %347 = vmatprep.subr.mxu0 0.0
      %348 = vmatpush1.msra.mxu0 0.0
      %349 = vmatprep.subr.mxu0 0.0
      %350 = vmatpush1.msra.mxu0 0.0
      %351 = vmatprep.subr.mxu0 0.0
      %352 = vmatpush1.msra.mxu0 0.0
      %353 = vmatprep.mubr.f32.mxu0 0.0
      %354 = vmatmul.mubr.f32.gmra.mrb[0].mxu0 %v262
      %v355 = vpop.f32.mrb[0].mxu0
      %v356 = vadd.f32 0.0, %v355
      %v357 = vpop.f32.mrb[0].mxu0
      %358 = vmatprep.mubr.f32.mxu0 0.0
      %359 = vmatmul.mubr.f32.gmra.mrb[0].mxu0 %v265
      %v360 = vpop.f32.mrb[0].mxu0
      %v361 = vadd.f32 0.0, %v360
      %v362 = vpop.f32.mrb[0].mxu0
      %363 = vmatprep.mubr.f32.mxu0 0.0
      %364 = vmatmul.mubr.f32.gmra.mrb[0].mxu0 %v268
      %v365 = vpop.f32.mrb[0].mxu0
      %v366 = vadd.f32 0.0, %v365
      %v367 = vpop.f32.mrb[0].mxu0
      %368 = vmatprep.mubr.f32.mxu0 0.0
      %369 = vmatmul.mubr.f32.gmra.mrb[0].mxu0 %v271
      %v370 = vpop.f32.mrb[0].mxu0
      %v371 = vadd.f32 0.0, %v370
      %v372 = vpop.f32.mrb[0].mxu0
      %373 = vmatprep.mubr.f32.mxu0 0.0
      %374 = vmatmul.mubr.f32.gmra.mrb[0].mxu0 %v274
      %v375 = vpop.f32.mrb[0].mxu0
      %v376 = vadd.f32 0.0, %v375
      %v377 = vpop.f32.mrb[0].mxu0
      %378 = vmatprep.mubr.f32.mxu0 0.0
      %379 = vmatmul.mubr.f32.gmra.mrb[0].mxu0 %v277
      %v380 = vpop.f32.mrb[0].mxu0
      %v381 = vadd.f32 0.0, %v380
      %v382 = vpop.f32.mrb[0].mxu0
      %383 = vmatprep.mubr.f32.mxu0 0.0
      %384 = vmatmul.mubr.f32.gmra.mrb[0].mxu0 %v280
      %v385 = vpop.f32.mrb[0].mxu0
      %v386 = vadd.f32 0.0, %v385
      %v387 = vpop.f32.mrb[0].mxu0
      %388 = vmatprep.mubr.f32.mxu0 0.0
      %389 = vmatmul.mubr.f32.gmra.mrb[0].mxu0 %v283
      %v390 = vpop.f32.mrb[0].mxu0
      %v391 = vadd.f32 0.0, %v390
      %v392 = vpop.f32.mrb[0].mxu0
      %393 = vdwg.mxu0
      %v394 = vld [vmem:[%s2] sm:$0xff]
      %v395 = vld [vmem:[%s2 + $0x8] sm:$0xff]
      %v396 = vld [vmem:[%s2 + $0x10] sm:$0xff]
      %v397 = vld [vmem:[%s2 + $0x18] sm:$0xff]
      %v398 = vld [vmem:[%s2 + $0x20] sm:$0xff]
      %v399 = vld [vmem:[%s2 + $0x28] sm:$0xff]
      %v400 = vld [vmem:[%s2 + $0x30] sm:$0xff]
      %v401 = vld [vmem:[%s2 + $0x38] sm:$0xff]
      %403 = vset.pattern.permute.xlu0 0
      %404 = vperm.xlu0 %403, %v394
      %v405 = vpop.permute.xlu0 %404
      %408 = vset.pattern.permute.xlu0 0
      %409 = vperm.xlu0 %408, %v395
      %v410 = vpop.permute.xlu0 %409
      %413 = vset.pattern.permute.xlu0 0
      %414 = vperm.xlu0 %413, %v396
      %v415 = vpop.permute.xlu0 %414
      %418 = vset.pattern.permute.xlu0 0
      %419 = vperm.xlu0 %418, %v397
      %v420 = vpop.permute.xlu0 %419
      %423 = vset.pattern.permute.xlu0 0
      %424 = vperm.xlu0 %423, %v398
      %v425 = vpop.permute.xlu0 %424
      %428 = vset.pattern.permute.xlu0 0
      %429 = vperm.xlu0 %428, %v399
      %v430 = vpop.permute.xlu0 %429
      %433 = vset.pattern.permute.xlu0 0
      %434 = vperm.xlu0 %433, %v400
      %v435 = vpop.permute.xlu0 %434
      %438 = vset.pattern.permute.xlu0 0
      %439 = vperm.xlu0 %438, %v401
      %v440 = vpop.permute.xlu0 %439
      %v442 = vmul.f32 %v356, %v405
      %v443 = vmul.f32 %v361, %v410
      %v444 = vmul.f32 %v366, %v415
      %v445 = vmul.f32 %v371, %v420
      %v446 = vmul.f32 %v376, %v425
      %v447 = vmul.f32 %v381, %v430
      %v448 = vmul.f32 %v386, %v435
      %v449 = vmul.f32 %v391, %v440
      %450 = vset.pattern.permute.xlu0 1
      %451 = vperm.xlu0 %450, %v394
      %v452 = vpop.permute.xlu0 %451
      %454 = vset.pattern.permute.xlu0 1
      %455 = vperm.xlu0 %454, %v395
      %v456 = vpop.permute.xlu0 %455
      %458 = vset.pattern.permute.xlu0 1
      %459 = vperm.xlu0 %458, %v396
      %v460 = vpop.permute.xlu0 %459
      %462 = vset.pattern.permute.xlu0 1
      %463 = vperm.xlu0 %462, %v397
      %v464 = vpop.permute.xlu0 %463
      %466 = vset.pattern.permute.xlu0 1
      %467 = vperm.xlu0 %466, %v398
      %v468 = vpop.permute.xlu0 %467
      %470 = vset.pattern.permute.xlu0 1
      %471 = vperm.xlu0 %470, %v399
      %v472 = vpop.permute.xlu0 %471
      %474 = vset.pattern.permute.xlu0 1
      %475 = vperm.xlu0 %474, %v400
      %v476 = vpop.permute.xlu0 %475
      %478 = vset.pattern.permute.xlu0 1
      %479 = vperm.xlu0 %478, %v401
      %v480 = vpop.permute.xlu0 %479
      %v482 = vadd.f32 %v442, %v452
      %v483 = vadd.f32 %v443, %v456
      %v484 = vadd.f32 %v444, %v460
      %v485 = vadd.f32 %v445, %v464
      %v486 = vadd.f32 %v446, %v468
      %v487 = vadd.f32 %v447, %v472
      %v488 = vadd.f32 %v448, %v476
      %v489 = vadd.f32 %v449, %v480
      %v490 = vmax.f32 %v482, 0.0
      %v491 = vmax.f32 %v483, 0.0
      %v492 = vmax.f32 %v484, 0.0
      %v493 = vmax.f32 %v485, 0.0
      %v494 = vmax.f32 %v486, 0.0
      %v495 = vmax.f32 %v487, 0.0
      %v496 = vmax.f32 %v488, 0.0
      %v497 = vmax.f32 %v489, 0.0
      %v498 = vld [vmem:[%s3] sm:$0xff]
      %v499 = vld [vmem:[%s3 + $0x8] sm:$0xff]
      %v500 = vld [vmem:[%s3 + $0x10] sm:$0xff]
      %v501 = vld [vmem:[%s3 + $0x18] sm:$0xff]
      %v502 = vld [vmem:[%s3 + $0x20] sm:$0xff]
      %v503 = vld [vmem:[%s3 + $0x28] sm:$0xff]
      %v504 = vld [vmem:[%s3 + $0x30] sm:$0xff]
      %v505 = vld [vmem:[%s3 + $0x38] sm:$0xff]
      %vm506 = vcmask 523264
      %v508 = vsel %vm506, %v498, 0
      %v511 = vsel %vm506, %v499, 0
      %v514 = vsel %vm506, %v500, 0
      %v517 = vsel %vm506, %v501, 0
      %v520 = vsel %vm506, %v502, 0
      %v523 = vsel %vm506, %v503, 0
      %v526 = vsel %vm506, %v504, 0
      %v529 = vsel %vm506, %v505, 0
      %531 = vmatprep.subr.mxu0 0.0
      %532 = vmatpush1.msra.mxu0 %v490
      %533 = vmatprep.subr.mxu0 0.0
      %534 = vmatpush1.msra.mxu0 %v491
      %535 = vmatprep.subr.mxu0 0.0
      %536 = vmatpush1.msra.mxu0 %v492
      %537 = vmatprep.subr.mxu0 0.0
      %538 = vmatpush1.msra.mxu0 %v493
      %539 = vmatprep.subr.mxu0 0.0
      %540 = vmatpush1.msra.mxu0 %v494
      %541 = vmatprep.subr.mxu0 0.0
      %542 = vmatpush1.msra.mxu0 %v495
      %543 = vmatprep.subr.mxu0 0.0
      %544 = vmatpush1.msra.mxu0 %v496
      %545 = vmatprep.subr.mxu0 0.0
      %546 = vmatpush1.msra.mxu0 %v497
      %547 = vmatprep.subr.mxu0 0.0
      %548 = vmatpush1.msra.mxu0 0.0
      %549 = vmatprep.subr.mxu0 0.0
      %550 = vmatpush1.msra.mxu0 0.0
      %551 = vmatprep.subr.mxu0 0.0
      %552 = vmatpush1.msra.mxu0 0.0
      %553 = vmatprep.subr.mxu0 0.0
      %554 = vmatpush1.msra.mxu0 0.0
      %555 = vmatprep.subr.mxu0 0.0
      %556 = vmatpush1.msra.mxu0 0.0
      %557 = vmatprep.subr.mxu0 0.0
      %558 = vmatpush1.msra.mxu0 0.0
      %559 = vmatprep.subr.mxu0 0.0
      %560 = vmatpush1.msra.mxu0 0.0
      %561 = vmatprep.subr.mxu0 0.0
      %562 = vmatpush1.msra.mxu0 0.0
      %563 = vmatprep.subr.mxu0 0.0
      %564 = vmatpush1.msra.mxu0 0.0
      %565 = vmatprep.subr.mxu0 0.0
      %566 = vmatpush1.msra.mxu0 0.0
      %567 = vmatprep.subr.mxu0 0.0
      %568 = vmatpush1.msra.mxu0 0.0
      %569 = vmatprep.subr.mxu0 0.0
      %570 = vmatpush1.msra.mxu0 0.0
      %571 = vmatprep.subr.mxu0 0.0
      %572 = vmatpush1.msra.mxu0 0.0
      %573 = vmatprep.subr.mxu0 0.0
      %574 = vmatpush1.msra.mxu0 0.0
      %575 = vmatprep.subr.mxu0 0.0
      %576 = vmatpush1.msra.mxu0 0.0
      %577 = vmatprep.subr.mxu0 0.0
      %578 = vmatpush1.msra.mxu0 0.0
      %579 = vmatprep.subr.mxu0 0.0
      %580 = vmatpush1.msra.mxu0 0.0
      %581 = vmatprep.subr.mxu0 0.0
      %582 = vmatpush1.msra.mxu0 0.0
      %583 = vmatprep.subr.mxu0 0.0
      %584 = vmatpush1.msra.mxu0 0.0
      %585 = vmatprep.subr.mxu0 0.0
      %586 = vmatpush1.msra.mxu0 0.0
      %587 = vmatprep.subr.mxu0 0.0
      %588 = vmatpush1.msra.mxu0 0.0
      %589 = vmatprep.subr.mxu0 0.0
      %590 = vmatpush1.msra.mxu0 0.0
      %591 = vmatprep.subr.mxu0 0.0
      %592 = vmatpush1.msra.mxu0 0.0
      %593 = vmatprep.subr.mxu0 0.0
      %594 = vmatpush1.msra.mxu0 0.0
      %595 = vmatprep.mubr.f32.mxu0 0.0
      %596 = vmatmul.mubr.f32.gmra.mrb[0].mxu0 %v508
      %v597 = vpop.f32.mrb[0].mxu0
      %v598 = vadd.f32 0.0, %v597
      %v599 = vpop.f32.mrb[0].mxu0
      %600 = vmatprep.mubr.f32.mxu0 0.0
      %601 = vmatmul.mubr.f32.gmra.mrb[0].mxu0 %v511
      %v602 = vpop.f32.mrb[0].mxu0
      %v603 = vadd.f32 0.0, %v602
      %v604 = vpop.f32.mrb[0].mxu0
      %605 = vmatprep.mubr.f32.mxu0 0.0
      %606 = vmatmul.mubr.f32.gmra.mrb[0].mxu0 %v514
      %v607 = vpop.f32.mrb[0].mxu0
      %v608 = vadd.f32 0.0, %v607
      %v609 = vpop.f32.mrb[0].mxu0
      %610 = vmatprep.mubr.f32.mxu0 0.0
      %611 = vmatmul.mubr.f32.gmra.mrb[0].mxu0 %v517
      %v612 = vpop.f32.mrb[0].mxu0
      %v613 = vadd.f32 0.0, %v612
      %v614 = vpop.f32.mrb[0].mxu0
      %615 = vmatprep.mubr.f32.mxu0 0.0
      %616 = vmatmul.mubr.f32.gmra.mrb[0].mxu0 %v520
      %v617 = vpop.f32.mrb[0].mxu0
      %v618 = vadd.f32 0.0, %v617
      %v619 = vpop.f32.mrb[0].mxu0
      %620 = vmatprep.mubr.f32.mxu0 0.0
      %621 = vmatmul.mubr.f32.gmra.mrb[0].mxu0 %v523
      %v622 = vpop.f32.mrb[0].mxu0
      %v623 = vadd.f32 0.0, %v622
      %v624 = vpop.f32.mrb[0].mxu0
      %625 = vmatprep.mubr.f32.mxu0 0.0
      %626 = vmatmul.mubr.f32.gmra.mrb[0].mxu0 %v526
      %v627 = vpop.f32.mrb[0].mxu0
      %v628 = vadd.f32 0.0, %v627
      %v629 = vpop.f32.mrb[0].mxu0
      %630 = vmatprep.mubr.f32.mxu0 0.0
      %631 = vmatmul.mubr.f32.gmra.mrb[0].mxu0 %v529
      %v632 = vpop.f32.mrb[0].mxu0
      %v633 = vadd.f32 0.0, %v632
      %v634 = vpop.f32.mrb[0].mxu0
      %635 = vdwg.mxu0
      %v636 = vld [vmem:[%s4] sm:$0xff]
      %v637 = vld [vmem:[%s4 + $0x8] sm:$0xff]
      %v638 = vld [vmem:[%s4 + $0x10] sm:$0xff]
      %v639 = vld [vmem:[%s4 + $0x18] sm:$0xff]
      %v640 = vld [vmem:[%s4 + $0x20] sm:$0xff]
      %v641 = vld [vmem:[%s4 + $0x28] sm:$0xff]
      %v642 = vld [vmem:[%s4 + $0x30] sm:$0xff]
      %v643 = vld [vmem:[%s4 + $0x38] sm:$0xff]
      %vm644 = vcmask 130048
      %v645 = vsel %vm644, %v598, 0.0
      %646 = vadd.xlane.f32.xlu0 %v645
      %v647 = vpop.xlane.xlu0 %646
      %v648 = vsel %vm644, %v603, 0.0
      %649 = vadd.xlane.f32.xlu0 %v648
      %v650 = vpop.xlane.xlu0 %649
      %v651 = vsel %vm644, %v608, 0.0
      %652 = vadd.xlane.f32.xlu0 %v651
      %v653 = vpop.xlane.xlu0 %652
      %v654 = vsel %vm644, %v613, 0.0
      %655 = vadd.xlane.f32.xlu0 %v654
      %v656 = vpop.xlane.xlu0 %655
      %v657 = vsel %vm644, %v618, 0.0
      %658 = vadd.xlane.f32.xlu0 %v657
      %v659 = vpop.xlane.xlu0 %658
      %v660 = vsel %vm644, %v623, 0.0
      %661 = vadd.xlane.f32.xlu0 %v660
      %v662 = vpop.xlane.xlu0 %661
      %v663 = vsel %vm644, %v628, 0.0
      %664 = vadd.xlane.f32.xlu0 %v663
      %v665 = vpop.xlane.xlu0 %664
      %v666 = vsel %vm644, %v633, 0.0
      %667 = vadd.xlane.f32.xlu0 %v666
      %v668 = vpop.xlane.xlu0 %667
      %v669 = vadd.f32 %v636, %v647
      %v670 = vadd.f32 %v637, %v650
      %v671 = vadd.f32 %v638, %v653
      %v672 = vadd.f32 %v639, %v656
      %v673 = vadd.f32 %v640, %v659
      %v674 = vadd.f32 %v641, %v662
      %v675 = vadd.f32 %v642, %v665
      %v676 = vadd.f32 %v643, %v668
      %vm677 = vcmask 7168
      %678 = vst.msk [vmem:[%s4] sm:$0xff] %vm677, %v669
      %679 = vst.msk [vmem:[%s4 + $0x8] sm:$0xff] %vm677, %v670
      %680 = vst.msk [vmem:[%s4 + $0x10] sm:$0xff] %vm677, %v671
      %681 = vst.msk [vmem:[%s4 + $0x18] sm:$0xff] %vm677, %v672
      %682 = vst.msk [vmem:[%s4 + $0x20] sm:$0xff] %vm677, %v673
      %683 = vst.msk [vmem:[%s4 + $0x28] sm:$0xff] %vm677, %v674
      %684 = vst.msk [vmem:[%s4 + $0x30] sm:$0xff] %vm677, %v675
      %685 = vst.msk [vmem:[%s4 + $0x38] sm:$0xff] %vm677, %v676
      %v686 = vld [vmem:[%s5] sm:$0xff]
      %v687 = vld [vmem:[%s5 + $0x8] sm:$0xff]
      %v688 = vld [vmem:[%s5 + $0x10] sm:$0xff]
      %v689 = vld [vmem:[%s5 + $0x18] sm:$0xff]
      %v690 = vld [vmem:[%s5 + $0x20] sm:$0xff]
      %v691 = vld [vmem:[%s5 + $0x28] sm:$0xff]
      %v692 = vld [vmem:[%s5 + $0x30] sm:$0xff]
      %v693 = vld [vmem:[%s5 + $0x38] sm:$0xff]
      %v694 = vmul.f32 %v598, %v598
      %v695 = vmul.f32 %v603, %v603
      %v696 = vmul.f32 %v608, %v608
      %v697 = vmul.f32 %v613, %v613
      %v698 = vmul.f32 %v618, %v618
      %v699 = vmul.f32 %v623, %v623
      %v700 = vmul.f32 %v628, %v628
      %v701 = vmul.f32 %v633, %v633
      %v702 = vsel %vm644, %v694, 0.0
      %703 = vadd.xlane.f32.xlu0 %v702
      %v704 = vpop.xlane.xlu0 %703
      %v705 = vsel %vm644, %v695, 0.0
      %706 = vadd.xlane.f32.xlu0 %v705
      %v707 = vpop.xlane.xlu0 %706
      %v708 = vsel %vm644, %v696, 0.0
      %709 = vadd.xlane.f32.xlu0 %v708
      %v710 = vpop.xlane.xlu0 %709
      %v711 = vsel %vm644, %v697, 0.0
      %712 = vadd.xlane.f32.xlu0 %v711
      %v713 = vpop.xlane.xlu0 %712
      %v714 = vsel %vm644, %v698, 0.0
      %715 = vadd.xlane.f32.xlu0 %v714
      %v716 = vpop.xlane.xlu0 %715
      %v717 = vsel %vm644, %v699, 0.0
      %718 = vadd.xlane.f32.xlu0 %v717
      %v719 = vpop.xlane.xlu0 %718
      %v720 = vsel %vm644, %v700, 0.0
      %721 = vadd.xlane.f32.xlu0 %v720
      %v722 = vpop.xlane.xlu0 %721
      %v723 = vsel %vm644, %v701, 0.0
      %724 = vadd.xlane.f32.xlu0 %v723
      %v725 = vpop.xlane.xlu0 %724
      %v726 = vadd.f32 %v686, %v704
      %v727 = vadd.f32 %v687, %v707
      %v728 = vadd.f32 %v688, %v710
      %v729 = vadd.f32 %v689, %v713
      %v730 = vadd.f32 %v690, %v716
      %v731 = vadd.f32 %v691, %v719
      %v732 = vadd.f32 %v692, %v722
      %v733 = vadd.f32 %v693, %v725
      %734 = vst.msk [vmem:[%s5] sm:$0xff] %vm677, %v726
      %735 = vst.msk [vmem:[%s5 + $0x8] sm:$0xff] %vm677, %v727
      %736 = vst.msk [vmem:[%s5 + $0x10] sm:$0xff] %vm677, %v728
      %737 = vst.msk [vmem:[%s5 + $0x18] sm:$0xff] %vm677, %v729
      %738 = vst.msk [vmem:[%s5 + $0x20] sm:$0xff] %vm677, %v730
      %739 = vst.msk [vmem:[%s5 + $0x28] sm:$0xff] %vm677, %v731
      %740 = vst.msk [vmem:[%s5 + $0x30] sm:$0xff] %vm677, %v732
      %741 = vst.msk [vmem:[%s5 + $0x38] sm:$0xff] %vm677, %v733
      // Predicated region
      $region41: #{s_mlp_1_forward.4} parent=35 // pred_check
        %p742 = pneg %p133
      $region42: #{s_mlp_1_forward.4} parent=35 // pred_check_branch
        %744 = sbr.rel (%p742) target = $region44
      $region43: #{s_mlp_1_forward.4} parent=35 // pred_region
        _
      $region44: #{s_mlp_1_forward.4} parent=35 // pred_fallthru
        _
      // Predicated region
      $region45: #{s_mlp_1_forward.4} parent=35 // pred_check
        %p745 = pneg %p154
      $region46: #{s_mlp_1_forward.4} parent=35 // pred_check_branch
        %747 = sbr.rel (%p745) target = $region48
      $region47: #{s_mlp_1_forward.4} parent=35 // pred_region
        _
      $region48: #{s_mlp_1_forward.4} parent=35 // pred_fallthru
        _
      // Predicated region
      $region49: #{s_mlp_1_forward.4} parent=35 // pred_check
        %p748 = pneg %p133
      $region50: #{s_mlp_1_forward.4} parent=35 // pred_check_branch
        %750 = sbr.rel (%p748) target = $region52
      $region51: #{s_mlp_1_forward.4} parent=35 // pred_region
        _
      $region52: #{s_mlp_1_forward.4} parent=35 // pred_fallthru
        _
      // Predicated region
      $region53: #{s_mlp_1_forward.4} parent=35 // pred_check
        %p751 = pneg %p154
      $region54: #{s_mlp_1_forward.4} parent=35 // pred_check_branch
        %753 = sbr.rel (%p751) target = $region56
      $region55: #{s_mlp_1_forward.4} parent=35 // pred_region
        _
      $region56: #{s_mlp_1_forward.4} parent=35 // pred_fallthru
        _
    $region36: #{s_mlp_1_forward.4} parent=5 // pred_fallthru
      _
    %p754 = scmp.le.s32.totalorder 2, %s12
    // Predicated region
    $region57: #{s_mlp_1_forward.4} parent=5 // pred_check
      %p755 = pneg %p754
    $region58: #{s_mlp_1_forward.4} parent=5 // pred_check_branch
      %757 = sbr.rel (%p755) target = $region60
    $region59: #{s_mlp_1_forward.4} parent=5 // pred_region
      %s758 = ssub.s32 %s12, 2
    $region60: #{s_mlp_1_forward.4} parent=5 // pred_fallthru
      _
  $region6: #{s_mlp_1_forward.4} parent=0 // loop_footer
    %s16 = sadd.s32 1, %s12
  $region7: #{s_mlp_1_forward.4} parent=0 // loop_footer_branch
    %11 = sbr.rel target = $region3
  $region8: #{s_mlp_1_forward.4} parent=0 // loop_exit
    _

// kernel: s_mlp_1_forward.5
$region0: #{s_mlp_1_forward.5}
  #allocation0 [shape = 'u32[]', space=smem, size = 0x4, offset = 0x4, fixed_abs, tag = 'smem constant byte address 0x4 - core index']
  #allocation1 [shape = 'u32[144,128]{1,0:T(1,128)}', space=vmem, size = 0x12000, scoped, tag = 'internal scratch']
  %s0 = inlined_call_operand.vmem [shape: f32[2,3,16], index: 0, kind: input, shape index: {}]
  %s1 = inlined_call_operand.vmem [shape: f32[64,3], index: 1, kind: input, shape index: {}]
  %s2 = inlined_call_operand.vmem [shape: f32[64,4], index: 2, kind: input, shape index: {}]
  %s3 = inlined_call_operand.vmem [shape: f32[64,64], index: 3, kind: input, shape index: {}]
  %s4 = inlined_call_operand.vmem [shape: f32[2,64,16], index: 4, kind: output, shape index: {}]
  %s5 = sld [smem:[#allocation0]]
  $region49: #{s_mlp_1_forward.5} parent=0
    _
  %s7 = ssub.s32 1, %s5
  %s8 = scalar_select 0, %s7, %s5
  loop: start=0, step=1, limit=4
  $region2: #{s_mlp_1_forward.5} parent=0 // loop_pre_header
    _
  $region3: #{s_mlp_1_forward.5} parent=0 // loop_header
    %s10 = sphi 0, %s14
    %p11 = scmp.ge.s32.totalorder %s10, 4
    %s17 = sphi 0, %s29
    %s18 = sphi 0, %s25
    %s19 = sphi 0, %s17
    %s20 = sphi 0, %s18
    %s21 = sphi 0, %s19
    %s22 = sphi 0, %s20
    %s34 = sphi 0, %s36
    %s37 = sphi 0, %s34
    %s38 = sphi 0, %s37
    %s54 = sphi 0, %s38
    %s58 = sphi 0, %s58
    %s60 = sphi 0, %s58
    %s61 = sphi 0, %s60
    %s75 = sphi 0, %s61
    %s79 = sphi 0, %s79
    %s81 = sphi 0, %s79
    %s82 = sphi 0, %s81
    %s96 = sphi 0, %s82
    %s100 = sphi 0, %s100
    %s102 = sphi 0, %s100
    %s103 = sphi 0, %s102
    %s117 = sphi 0, %s103
    %s125 = sphi 0, %s127
    %s128 = sphi 0, %s125
    %s129 = sphi 0, %s128
    %s145 = sphi 0, %s129
  $region4: #{s_mlp_1_forward.5} parent=0 // loop_header_branch
    %13 = sbr.rel (%p11) target = $region8
  $region5: #{s_mlp_1_forward.5} parent=0 // loop_body
    %s15 = ssub.s32 %s10, 1
    %s16 = ssub.s32 %s10, 2
    %s23 = sadd.s32 1, %s18
    %p24 = scmp.ge.s32.totalorder %s23, 1
    %s25 = scalar_select %p24, 0, %s23
    %s26 = sadd.s32 1, %s17
    %s27 = scalar_select %p24, %s26, %s17
    %p28 = scmp.ge.s32.totalorder %s27, 2
    %s29 = scalar_select %p28, 0, %s27
    %s30 = ssub.s32 %s17, %s29
    %s31 = ssub.s32 %s18, %s25
    %s32 = sor.u32 %s30, %s31
    %p33 = scmp.eq.s32.totalorder %s32, 0
    %s35 = sadd.s32 %s34, 1
    %s36 = scalar_select %p33, %s34, %s35
    %p39 = pneg %p33
    %p40 = scmp.eq.s32.totalorder %s10, 1
    %p41 = por %p39, %p40
    %p42 = scmp.ne.s32.totalorder %s34, %s37
    %p43 = scmp.eq.s32.totalorder %s10, 0
    %p44 = por %p42, %p43
    %p45 = scmp.ne.s32.totalorder %s34, %s37
    %p46 = scmp.eq.s32.totalorder %s15, 1
    %p47 = por %p45, %p46
    %p48 = scmp.ne.s32.totalorder %s37, %s38
    %p49 = scmp.eq.s32.totalorder %s15, 0
    %p50 = por %p48, %p49
    %p51 = scmp.ne.s32.totalorder %s37, %s38
    %p52 = scmp.eq.s32.totalorder %s16, 1
    %p53 = por %p51, %p52
    %p55 = scmp.ne.s32.totalorder %s38, %s54
    %p56 = scmp.eq.s32.totalorder %s16, 0
    %p57 = por %p55, %p56
    %s59 = sadd.s32 %s58, 1
    %p62 = scmp.eq.s32.totalorder %s10, 1
    %p63 = scmp.ne.s32.totalorder %s58, %s60
    %p64 = scmp.eq.s32.totalorder %s10, 0
    %p65 = por %p63, %p64
    %p66 = scmp.ne.s32.totalorder %s58, %s60
    %p67 = scmp.eq.s32.totalorder %s15, 1
    %p68 = por %p66, %p67
    %p69 = scmp.ne.s32.totalorder %s60, %s61
    %p70 = scmp.eq.s32.totalorder %s15, 0
    %p71 = por %p69, %p70
    %p72 = scmp.ne.s32.totalorder %s60, %s61
    %p73 = scmp.eq.s32.totalorder %s16, 1
    %p74 = por %p72, %p73
    %p76 = scmp.ne.s32.totalorder %s61, %s75
    %p77 = scmp.eq.s32.totalorder %s16, 0
    %p78 = por %p76, %p77
    %s80 = sadd.s32 %s79, 1
    %p83 = scmp.eq.s32.totalorder %s10, 1
    %p84 = scmp.ne.s32.totalorder %s79, %s81
    %p85 = scmp.eq.s32.totalorder %s10, 0
    %p86 = por %p84, %p85
    %p87 = scmp.ne.s32.totalorder %s79, %s81
    %p88 = scmp.eq.s32.totalorder %s15, 1
    %p89 = por %p87, %p88
    %p90 = scmp.ne.s32.totalorder %s81, %s82
    %p91 = scmp.eq.s32.totalorder %s15, 0
    %p92 = por %p90, %p91
    %p93 = scmp.ne.s32.totalorder %s81, %s82
    %p94 = scmp.eq.s32.totalorder %s16, 1
    %p95 = por %p93, %p94
    %p97 = scmp.ne.s32.totalorder %s82, %s96
    %p98 = scmp.eq.s32.totalorder %s16, 0
    %p99 = por %p97, %p98
    %s101 = sadd.s32 %s100, 1
    %p104 = scmp.eq.s32.totalorder %s10, 1
    %p105 = scmp.ne.s32.totalorder %s100, %s102
    %p106 = scmp.eq.s32.totalorder %s10, 0
    %p107 = por %p105, %p106
    %p108 = scmp.ne.s32.totalorder %s100, %s102
    %p109 = scmp.eq.s32.totalorder %s15, 1
    %p110 = por %p108, %p109
    %p111 = scmp.ne.s32.totalorder %s102, %s103
    %p112 = scmp.eq.s32.totalorder %s15, 0
    %p113 = por %p111, %p112
    %p114 = scmp.ne.s32.totalorder %s102, %s103
    %p115 = scmp.eq.s32.totalorder %s16, 1
    %p116 = por %p114, %p115
    %p118 = scmp.ne.s32.totalorder %s103, %s117
    %p119 = scmp.eq.s32.totalorder %s16, 0
    %p120 = por %p118, %p119
    %s121 = ssub.s32 %s17, %s29
    %s122 = ssub.s32 %s18, %s25
    %s123 = sor.u32 %s121, %s122
    %p124 = scmp.eq.s32.totalorder %s123, 0
    %s126 = sadd.s32 %s125, 1
    %s127 = scalar_select %p124, %s125, %s126
    %p130 = pneg %p124
    %p131 = scmp.eq.s32.totalorder %s10, 1
    %p132 = por %p130, %p131
    %p133 = scmp.ne.s32.totalorder %s125, %s128
    %p134 = scmp.eq.s32.totalorder %s10, 0
    %p135 = por %p133, %p134
    %p136 = scmp.ne.s32.totalorder %s125, %s128
    %p137 = scmp.eq.s32.totalorder %s15, 1
    %p138 = por %p136, %p137
    %p139 = scmp.ne.s32.totalorder %s128, %s129
    %p140 = scmp.eq.s32.totalorder %s15, 0
    %p141 = por %p139, %p140
    %p142 = scmp.ne.s32.totalorder %s128, %s129
    %p143 = scmp.eq.s32.totalorder %s16, 1
    %p144 = por %p142, %p143
    %p146 = scmp.ne.s32.totalorder %s129, %s145
    %p147 = scmp.eq.s32.totalorder %s16, 0
    %p148 = por %p146, %p147
    %p149 = scmp.le.s32.totalorder 1, %s10
    %p150 = scmp.lt.s32.totalorder %s10, 3
    %p151 = pnand %p149, %p150
    %p152 = pneg %p151
    // Predicated region
    $region9: #{s_mlp_1_forward.5} parent=5 // pred_check
      _
    $region10: #{s_mlp_1_forward.5} parent=5 // pred_check_branch
      %154 = sbr.rel (%p151) target = $region12
    $region11: #{s_mlp_1_forward.5} parent=5 // pred_region
      %s155 = ssub.s32 %s10, 1
      // Predicated region
      $region13: #{s_mlp_1_forward.5} parent=11 // pred_check
        %p156 = pneg %p71
      $region14: #{s_mlp_1_forward.5} parent=11 // pred_check_branch
        %158 = sbr.rel (%p156) target = $region16
      $region15: #{s_mlp_1_forward.5} parent=11 // pred_region
        _
      $region16: #{s_mlp_1_forward.5} parent=11 // pred_fallthru
        _
      // Predicated region
      $region17: #{s_mlp_1_forward.5} parent=11 // pred_check
        %p159 = pneg %p92
      $region18: #{s_mlp_1_forward.5} parent=11 // pred_check_branch
        %161 = sbr.rel (%p159) target = $region20
      $region19: #{s_mlp_1_forward.5} parent=11 // pred_region
        _
      $region20: #{s_mlp_1_forward.5} parent=11 // pred_fallthru
        _
      // Predicated region
      $region21: #{s_mlp_1_forward.5} parent=11 // pred_check
        %p162 = pneg %p113
      $region22: #{s_mlp_1_forward.5} parent=11 // pred_check_branch
        %164 = sbr.rel (%p162) target = $region24
      $region23: #{s_mlp_1_forward.5} parent=11 // pred_region
        _
      $region24: #{s_mlp_1_forward.5} parent=11 // pred_fallthru
        _
    $region12: #{s_mlp_1_forward.5} parent=5 // pred_fallthru
      _
    %p165 = scmp.lt.s32.totalorder %s10, 2
    // Predicated region
    $region25: #{s_mlp_1_forward.5} parent=5 // pred_check
      %p166 = pneg %p165
    $region26: #{s_mlp_1_forward.5} parent=5 // pred_check_branch
      %168 = sbr.rel (%p166) target = $region28
    $region27: #{s_mlp_1_forward.5} parent=5 // pred_region
      // Predicated region
      $region29: #{s_mlp_1_forward.5} parent=27 // pred_check
        %p169 = pneg %p44
      $region30: #{s_mlp_1_forward.5} parent=27 // pred_check_branch
        %171 = sbr.rel (%p169) target = $region32
      $region31: #{s_mlp_1_forward.5} parent=27 // pred_region
        %p172 = scmp.lt.s32.totalorder %s17, 1
        %s173 = scalar_select %p172, %s17, 1
        %p174 = scmp.lt.s32.totalorder %s18, 0
        %s175 = scalar_select %p174, %s18, 0
        %s176 = sadd.s32 %s175, %s173
        %s177 = smul.addr %s176, 4
        %s178 = scalar_lea.vmem %s0, %s177
      $region32: #{s_mlp_1_forward.5} parent=27 // pred_fallthru
        _
    $region28: #{s_mlp_1_forward.5} parent=5 // pred_fallthru
      _
    %p179 = scmp.le.s32.totalorder 1, %s10
    %p180 = scmp.lt.s32.totalorder %s10, 3
    %p181 = pnand %p179, %p180
    %p182 = pneg %p181
    // Predicated region
    $region33: #{s_mlp_1_forward.5} parent=5 // pred_check
      _
    $region34: #{s_mlp_1_forward.5} parent=5 // pred_check_branch
      %184 = sbr.rel (%p181) target = $region36
    $region35: #{s_mlp_1_forward.5} parent=5 // pred_region
      %s185 = ssub.s32 %s10, 1
      %p186 = scmp.lt.s32.totalorder %s19, 1
      %s187 = scalar_select %p186, %s19, 1
      %p188 = scmp.lt.s32.totalorder %s20, 0
      %s189 = scalar_select %p188, %s20, 0
      %s190 = sadd.s32 %s189, %s187
      %s191 = smul.addr %s190, 4
      %s192 = scalar_lea.vmem %s0, %s191
      %p193 = pneg %p50
      %p194 = pneg %p47
      %p195 = pneg %p71
      %p196 = pneg %p68
      %p197 = pneg %p92
      %p198 = pneg %p89
      %p199 = pneg %p113
      %p200 = pneg %p110
      %p201 = pneg %p141
      %p202 = pneg %p138
      %p203 = scmp.lt.s32.totalorder %s19, 1
      %s204 = scalar_select %p203, %s19, 1
      %p205 = scmp.lt.s32.totalorder %s20, 0
      %s206 = scalar_select %p205, %s20, 0
      %s207 = smul.addr %s204, 8
      %s208 = sadd.s32 %s206, %s207
      %s209 = smul.addr %s208, 8
      %s210 = scalar_lea.vmem %s4, %s209
      %p211 = scmp.lt.s32.totalorder %s19, 1
      %s212 = scalar_select %p211, %s19, 1
      %p213 = scmp.lt.s32.totalorder %s20, 0
      %s214 = scalar_select %p213, %s20, 0
      %s215 = sadd.s32 %s214, %s212
      %s216 = smul.addr %s215, 4
      %s217 = scalar_lea.vmem %s0, %s216
      %p218 = scmp.lt.s32.totalorder %s19, 1
      %s219 = scalar_select %p218, %s19, 1
      %p220 = scmp.lt.s32.totalorder %s20, 0
      %s221 = scalar_select %p220, %s20, 0
      %s222 = smul.addr %s219, 8
      %s223 = sadd.s32 %s221, %s222
      %s224 = smul.addr %s223, 8
      %s225 = scalar_lea.vmem %s4, %s224
      %v226 = vld [vmem:[%s1] sm:$0xff]
      %v227 = vld [vmem:[%s1 + $0x8] sm:$0xff]
      %v228 = vld [vmem:[%s1 + $0x10] sm:$0xff]
      %v229 = vld [vmem:[%s1 + $0x18] sm:$0xff]
      %v230 = vld [vmem:[%s1 + $0x20] sm:$0xff]
      %v231 = vld [vmem:[%s1 + $0x28] sm:$0xff]
      %v232 = vld [vmem:[%s1 + $0x30] sm:$0xff]
      %v233 = vld [vmem:[%s1 + $0x38] sm:$0xff]
      %v234 = vld [vmem:[%s217] sm:$0x7]
      %vm235 = vcmask 23552
      %v237 = vsel %vm235, %v226, 0
      %v240 = vsel %vm235, %v227, 0
      %v243 = vsel %vm235, %v228, 0
      %v246 = vsel %vm235, %v229, 0
      %v249 = vsel %vm235, %v230, 0
      %v252 = vsel %vm235, %v231, 0
      %v255 = vsel %vm235, %v232, 0
      %v258 = vsel %vm235, %v233, 0
      %vm260 = vcmask 1042432
      %v262 = vsel %vm260, %v234, 0
      %264 = vmatprep.subr.mxu0 0.0
      %265 = vmatpush1.msra.mxu0 %v262
      %266 = vmatprep.subr.mxu0 0.0
      %267 = vmatpush1.msra.mxu0 0.0
      %268 = vmatprep.subr.mxu0 0.0
      %269 = vmatpush1.msra.mxu0 0.0
      %270 = vmatprep.subr.mxu0 0.0
      %271 = vmatpush1.msra.mxu0 0.0
      %272 = vmatprep.subr.mxu0 0.0
      %273 = vmatpush1.msra.mxu0 0.0
      %274 = vmatprep.subr.mxu0 0.0
      %275 = vmatpush1.msra.mxu0 0.0
      %276 = vmatprep.subr.mxu0 0.0
      %277 = vmatpush1.msra.mxu0 0.0
      %278 = vmatprep.subr.mxu0 0.0
      %279 = vmatpush1.msra.mxu0 0.0
      %280 = vmatprep.subr.mxu0 0.0
      %281 = vmatpush1.msra.mxu0 0.0
      %282 = vmatprep.subr.mxu0 0.0
      %283 = vmatpush1.msra.mxu0 0.0
      %284 = vmatprep.subr.mxu0 0.0
      %285 = vmatpush1.msra.mxu0 0.0
      %286 = vmatprep.subr.mxu0 0.0
      %287 = vmatpush1.msra.mxu0 0.0
      %288 = vmatprep.subr.mxu0 0.0
      %289 = vmatpush1.msra.mxu0 0.0
      %290 = vmatprep.subr.mxu0 0.0
      %291 = vmatpush1.msra.mxu0 0.0
      %292 = vmatprep.subr.mxu0 0.0
      %293 = vmatpush1.msra.mxu0 0.0
      %294 = vmatprep.subr.mxu0 0.0
      %295 = vmatpush1.msra.mxu0 0.0
      %296 = vmatprep.subr.mxu0 0.0
      %297 = vmatpush1.msra.mxu0 0.0
      %298 = vmatprep.subr.mxu0 0.0
      %299 = vmatpush1.msra.mxu0 0.0
      %300 = vmatprep.subr.mxu0 0.0
      %301 = vmatpush1.msra.mxu0 0.0
      %302 = vmatprep.subr.mxu0 0.0
      %303 = vmatpush1.msra.mxu0 0.0
      %304 = vmatprep.subr.mxu0 0.0
      %305 = vmatpush1.msra.mxu0 0.0
      %306 = vmatprep.subr.mxu0 0.0
      %307 = vmatpush1.msra.mxu0 0.0
      %308 = vmatprep.subr.mxu0 0.0
      %309 = vmatpush1.msra.mxu0 0.0
      %310 = vmatprep.subr.mxu0 0.0
      %311 = vmatpush1.msra.mxu0 0.0
      %312 = vmatprep.subr.mxu0 0.0
      %313 = vmatpush1.msra.mxu0 0.0
      %314 = vmatprep.subr.mxu0 0.0
      %315 = vmatpush1.msra.mxu0 0.0
      %316 = vmatprep.subr.mxu0 0.0
      %317 = vmatpush1.msra.mxu0 0.0
      %318 = vmatprep.subr.mxu0 0.0
      %319 = vmatpush1.msra.mxu0 0.0
      %320 = vmatprep.subr.mxu0 0.0
      %321 = vmatpush1.msra.mxu0 0.0
      %322 = vmatprep.subr.mxu0 0.0
      %323 = vmatpush1.msra.mxu0 0.0
      %324 = vmatprep.subr.mxu0 0.0
      %325 = vmatpush1.msra.mxu0 0.0
      %326 = vmatprep.subr.mxu0 0.0
      %327 = vmatpush1.msra.mxu0 0.0
      %328 = vmatprep.mubr.f32.mxu0 0.0
      %329 = vmatmul.mubr.f32.gmra.mrb[0].mxu0 %v237
      %v330 = vpop.f32.mrb[0].mxu0
      %v331 = vadd.f32 0.0, %v330
      %v332 = vpop.f32.mrb[0].mxu0
      %333 = vmatprep.mubr.f32.mxu0 0.0
      %334 = vmatmul.mubr.f32.gmra.mrb[0].mxu0 %v240
      %v335 = vpop.f32.mrb[0].mxu0
      %v336 = vadd.f32 0.0, %v335
      %v337 = vpop.f32.mrb[0].mxu0
      %338 = vmatprep.mubr.f32.mxu0 0.0
      %339 = vmatmul.mubr.f32.gmra.mrb[0].mxu0 %v243
      %v340 = vpop.f32.mrb[0].mxu0
      %v341 = vadd.f32 0.0, %v340
      %v342 = vpop.f32.mrb[0].mxu0
      %343 = vmatprep.mubr.f32.mxu0 0.0
      %344 = vmatmul.mubr.f32.gmra.mrb[0].mxu0 %v246
      %v345 = vpop.f32.mrb[0].mxu0
      %v346 = vadd.f32 0.0, %v345
      %v347 = vpop.f32.mrb[0].mxu0
      %348 = vmatprep.mubr.f32.mxu0 0.0
      %349 = vmatmul.mubr.f32.gmra.mrb[0].mxu0 %v249
      %v350 = vpop.f32.mrb[0].mxu0
      %v351 = vadd.f32 0.0, %v350
      %v352 = vpop.f32.mrb[0].mxu0
      %353 = vmatprep.mubr.f32.mxu0 0.0
      %354 = vmatmul.mubr.f32.gmra.mrb[0].mxu0 %v252
      %v355 = vpop.f32.mrb[0].mxu0
      %v356 = vadd.f32 0.0, %v355
      %v357 = vpop.f32.mrb[0].mxu0
      %358 = vmatprep.mubr.f32.mxu0 0.0
      %359 = vmatmul.mubr.f32.gmra.mrb[0].mxu0 %v255
      %v360 = vpop.f32.mrb[0].mxu0
      %v361 = vadd.f32 0.0, %v360
      %v362 = vpop.f32.mrb[0].mxu0
      %363 = vmatprep.mubr.f32.mxu0 0.0
      %364 = vmatmul.mubr.f32.gmra.mrb[0].mxu0 %v258
      %v365 = vpop.f32.mrb[0].mxu0
      %v366 = vadd.f32 0.0, %v365
      %v367 = vpop.f32.mrb[0].mxu0
      %368 = vdwg.mxu0
      %v369 = vld [vmem:[%s2] sm:$0xff]
      %v370 = vld [vmem:[%s2 + $0x8] sm:$0xff]
      %v371 = vld [vmem:[%s2 + $0x10] sm:$0xff]
      %v372 = vld [vmem:[%s2 + $0x18] sm:$0xff]
      %v373 = vld [vmem:[%s2 + $0x20] sm:$0xff]
      %v374 = vld [vmem:[%s2 + $0x28] sm:$0xff]
      %v375 = vld [vmem:[%s2 + $0x30] sm:$0xff]
      %v376 = vld [vmem:[%s2 + $0x38] sm:$0xff]
      %378 = vset.pattern.permute.xlu0 0
      %379 = vperm.xlu0 %378, %v369
      %v380 = vpop.permute.xlu0 %379
      %383 = vset.pattern.permute.xlu0 0
      %384 = vperm.xlu0 %383, %v370
      %v385 = vpop.permute.xlu0 %384
      %388 = vset.pattern.permute.xlu0 0
      %389 = vperm.xlu0 %388, %v371
      %v390 = vpop.permute.xlu0 %389
      %393 = vset.pattern.permute.xlu0 0
      %394 = vperm.xlu0 %393, %v372
      %v395 = vpop.permute.xlu0 %394
      %398 = vset.pattern.permute.xlu0 0
      %399 = vperm.xlu0 %398, %v373
      %v400 = vpop.permute.xlu0 %399
      %403 = vset.pattern.permute.xlu0 0
      %404 = vperm.xlu0 %403, %v374
      %v405 = vpop.permute.xlu0 %404
      %408 = vset.pattern.permute.xlu0 0
      %409 = vperm.xlu0 %408, %v375
      %v410 = vpop.permute.xlu0 %409
      %413 = vset.pattern.permute.xlu0 0
      %414 = vperm.xlu0 %413, %v376
      %v415 = vpop.permute.xlu0 %414
      %v417 = vmul.f32 %v331, %v380
      %v418 = vmul.f32 %v336, %v385
      %v419 = vmul.f32 %v341, %v390
      %v420 = vmul.f32 %v346, %v395
      %v421 = vmul.f32 %v351, %v400
      %v422 = vmul.f32 %v356, %v405
      %v423 = vmul.f32 %v361, %v410
      %v424 = vmul.f32 %v366, %v415
      %425 = vset.pattern.permute.xlu0 1
      %426 = vperm.xlu0 %425, %v369
      %v427 = vpop.permute.xlu0 %426
      %429 = vset.pattern.permute.xlu0 1
      %430 = vperm.xlu0 %429, %v370
      %v431 = vpop.permute.xlu0 %430
      %433 = vset.pattern.permute.xlu0 1
      %434 = vperm.xlu0 %433, %v371
      %v435 = vpop.permute.xlu0 %434
      %437 = vset.pattern.permute.xlu0 1
      %438 = vperm.xlu0 %437, %v372
      %v439 = vpop.permute.xlu0 %438
      %441 = vset.pattern.permute.xlu0 1
      %442 = vperm.xlu0 %441, %v373
      %v443 = vpop.permute.xlu0 %442
      %445 = vset.pattern.permute.xlu0 1
      %446 = vperm.xlu0 %445, %v374
      %v447 = vpop.permute.xlu0 %446
      %449 = vset.pattern.permute.xlu0 1
      %450 = vperm.xlu0 %449, %v375
      %v451 = vpop.permute.xlu0 %450
      %453 = vset.pattern.permute.xlu0 1
      %454 = vperm.xlu0 %453, %v376
      %v455 = vpop.permute.xlu0 %454
      %v457 = vadd.f32 %v417, %v427
      %v458 = vadd.f32 %v418, %v431
      %v459 = vadd.f32 %v419, %v435
      %v460 = vadd.f32 %v420, %v439
      %v461 = vadd.f32 %v421, %v443
      %v462 = vadd.f32 %v422, %v447
      %v463 = vadd.f32 %v423, %v451
      %v464 = vadd.f32 %v424, %v455
      %v465 = vmax.f32 %v457, 0.0
      %v466 = vmax.f32 %v458, 0.0
      %v467 = vmax.f32 %v459, 0.0
      %v468 = vmax.f32 %v460, 0.0
      %v469 = vmax.f32 %v461, 0.0
      %v470 = vmax.f32 %v462, 0.0
      %v471 = vmax.f32 %v463, 0.0
      %v472 = vmax.f32 %v464, 0.0
      %v473 = vld [vmem:[%s3] sm:$0xff]
      %v474 = vld [vmem:[%s3 + $0x8] sm:$0xff]
      %v475 = vld [vmem:[%s3 + $0x10] sm:$0xff]
      %v476 = vld [vmem:[%s3 + $0x18] sm:$0xff]
      %v477 = vld [vmem:[%s3 + $0x20] sm:$0xff]
      %v478 = vld [vmem:[%s3 + $0x28] sm:$0xff]
      %v479 = vld [vmem:[%s3 + $0x30] sm:$0xff]
      %v480 = vld [vmem:[%s3 + $0x38] sm:$0xff]
      %vm481 = vcmask 523264
      %v483 = vsel %vm481, %v473, 0
      %v486 = vsel %vm481, %v474, 0
      %v489 = vsel %vm481, %v475, 0
      %v492 = vsel %vm481, %v476, 0
      %v495 = vsel %vm481, %v477, 0
      %v498 = vsel %vm481, %v478, 0
      %v501 = vsel %vm481, %v479, 0
      %v504 = vsel %vm481, %v480, 0
      %506 = vmatprep.subr.mxu0 0.0
      %507 = vmatpush1.msra.mxu0 %v465
      %508 = vmatprep.subr.mxu0 0.0
      %509 = vmatpush1.msra.mxu0 %v466
      %510 = vmatprep.subr.mxu0 0.0
      %511 = vmatpush1.msra.mxu0 %v467
      %512 = vmatprep.subr.mxu0 0.0
      %513 = vmatpush1.msra.mxu0 %v468
      %514 = vmatprep.subr.mxu0 0.0
      %515 = vmatpush1.msra.mxu0 %v469
      %516 = vmatprep.subr.mxu0 0.0
      %517 = vmatpush1.msra.mxu0 %v470
      %518 = vmatprep.subr.mxu0 0.0
      %519 = vmatpush1.msra.mxu0 %v471
      %520 = vmatprep.subr.mxu0 0.0
      %521 = vmatpush1.msra.mxu0 %v472
      %522 = vmatprep.subr.mxu0 0.0
      %523 = vmatpush1.msra.mxu0 0.0
      %524 = vmatprep.subr.mxu0 0.0
      %525 = vmatpush1.msra.mxu0 0.0
      %526 = vmatprep.subr.mxu0 0.0
      %527 = vmatpush1.msra.mxu0 0.0
      %528 = vmatprep.subr.mxu0 0.0
      %529 = vmatpush1.msra.mxu0 0.0
      %530 = vmatprep.subr.mxu0 0.0
      %531 = vmatpush1.msra.mxu0 0.0
      %532 = vmatprep.subr.mxu0 0.0
      %533 = vmatpush1.msra.mxu0 0.0
      %534 = vmatprep.subr.mxu0 0.0
      %535 = vmatpush1.msra.mxu0 0.0
      %536 = vmatprep.subr.mxu0 0.0
      %537 = vmatpush1.msra.mxu0 0.0
      %538 = vmatprep.subr.mxu0 0.0
      %539 = vmatpush1.msra.mxu0 0.0
      %540 = vmatprep.subr.mxu0 0.0
      %541 = vmatpush1.msra.mxu0 0.0
      %542 = vmatprep.subr.mxu0 0.0
      %543 = vmatpush1.msra.mxu0 0.0
      %544 = vmatprep.subr.mxu0 0.0
      %545 = vmatpush1.msra.mxu0 0.0
      %546 = vmatprep.subr.mxu0 0.0
      %547 = vmatpush1.msra.mxu0 0.0
      %548 = vmatprep.subr.mxu0 0.0
      %549 = vmatpush1.msra.mxu0 0.0
      %550 = vmatprep.subr.mxu0 0.0
      %551 = vmatpush1.msra.mxu0 0.0
      %552 = vmatprep.subr.mxu0 0.0
      %553 = vmatpush1.msra.mxu0 0.0
      %554 = vmatprep.subr.mxu0 0.0
      %555 = vmatpush1.msra.mxu0 0.0
      %556 = vmatprep.subr.mxu0 0.0
      %557 = vmatpush1.msra.mxu0 0.0
      %558 = vmatprep.subr.mxu0 0.0
      %559 = vmatpush1.msra.mxu0 0.0
      %560 = vmatprep.subr.mxu0 0.0
      %561 = vmatpush1.msra.mxu0 0.0
      %562 = vmatprep.subr.mxu0 0.0
      %563 = vmatpush1.msra.mxu0 0.0
      %564 = vmatprep.subr.mxu0 0.0
      %565 = vmatpush1.msra.mxu0 0.0
      %566 = vmatprep.subr.mxu0 0.0
      %567 = vmatpush1.msra.mxu0 0.0
      %568 = vmatprep.subr.mxu0 0.0
      %569 = vmatpush1.msra.mxu0 0.0
      %570 = vmatprep.mubr.f32.mxu0 0.0
      %571 = vmatmul.mubr.f32.gmra.mrb[0].mxu0 %v483
      %v572 = vpop.f32.mrb[0].mxu0
      %v573 = vadd.f32 0.0, %v572
      %v574 = vpop.f32.mrb[0].mxu0
      %575 = vmatprep.mubr.f32.mxu0 0.0
      %576 = vmatmul.mubr.f32.gmra.mrb[0].mxu0 %v486
      %v577 = vpop.f32.mrb[0].mxu0
      %v578 = vadd.f32 0.0, %v577
      %v579 = vpop.f32.mrb[0].mxu0
      %580 = vmatprep.mubr.f32.mxu0 0.0
      %581 = vmatmul.mubr.f32.gmra.mrb[0].mxu0 %v489
      %v582 = vpop.f32.mrb[0].mxu0
      %v583 = vadd.f32 0.0, %v582
      %v584 = vpop.f32.mrb[0].mxu0
      %585 = vmatprep.mubr.f32.mxu0 0.0
      %586 = vmatmul.mubr.f32.gmra.mrb[0].mxu0 %v492
      %v587 = vpop.f32.mrb[0].mxu0
      %v588 = vadd.f32 0.0, %v587
      %v589 = vpop.f32.mrb[0].mxu0
      %590 = vmatprep.mubr.f32.mxu0 0.0
      %591 = vmatmul.mubr.f32.gmra.mrb[0].mxu0 %v495
      %v592 = vpop.f32.mrb[0].mxu0
      %v593 = vadd.f32 0.0, %v592
      %v594 = vpop.f32.mrb[0].mxu0
      %595 = vmatprep.mubr.f32.mxu0 0.0
      %596 = vmatmul.mubr.f32.gmra.mrb[0].mxu0 %v498
      %v597 = vpop.f32.mrb[0].mxu0
      %v598 = vadd.f32 0.0, %v597
      %v599 = vpop.f32.mrb[0].mxu0
      %600 = vmatprep.mubr.f32.mxu0 0.0
      %601 = vmatmul.mubr.f32.gmra.mrb[0].mxu0 %v501
      %v602 = vpop.f32.mrb[0].mxu0
      %v603 = vadd.f32 0.0, %v602
      %v604 = vpop.f32.mrb[0].mxu0
      %605 = vmatprep.mubr.f32.mxu0 0.0
      %606 = vmatmul.mubr.f32.gmra.mrb[0].mxu0 %v504
      %v607 = vpop.f32.mrb[0].mxu0
      %v608 = vadd.f32 0.0, %v607
      %v609 = vpop.f32.mrb[0].mxu0
      %610 = vdwg.mxu0
      %611 = vset.pattern.permute.xlu0 2
      %612 = vperm.xlu0 %611, %v369
      %v613 = vpop.permute.xlu0 %612
      %615 = vset.pattern.permute.xlu0 2
      %616 = vperm.xlu0 %615, %v370
      %v617 = vpop.permute.xlu0 %616
      %619 = vset.pattern.permute.xlu0 2
      %620 = vperm.xlu0 %619, %v371
      %v621 = vpop.permute.xlu0 %620
      %623 = vset.pattern.permute.xlu0 2
      %624 = vperm.xlu0 %623, %v372
      %v625 = vpop.permute.xlu0 %624
      %627 = vset.pattern.permute.xlu0 2
      %628 = vperm.xlu0 %627, %v373
      %v629 = vpop.permute.xlu0 %628
      %631 = vset.pattern.permute.xlu0 2
      %632 = vperm.xlu0 %631, %v374
      %v633 = vpop.permute.xlu0 %632
      %635 = vset.pattern.permute.xlu0 2
      %636 = vperm.xlu0 %635, %v375
      %v637 = vpop.permute.xlu0 %636
      %639 = vset.pattern.permute.xlu0 2
      %640 = vperm.xlu0 %639, %v376
      %v641 = vpop.permute.xlu0 %640
      %v643 = vmul.f32 %v573, %v613
      %v644 = vmul.f32 %v578, %v617
      %v645 = vmul.f32 %v583, %v621
      %v646 = vmul.f32 %v588, %v625
      %v647 = vmul.f32 %v593, %v629
      %v648 = vmul.f32 %v598, %v633
      %v649 = vmul.f32 %v603, %v637
      %v650 = vmul.f32 %v608, %v641
      %651 = vset.pattern.permute.xlu0 3
      %652 = vperm.xlu0 %651, %v369
      %v653 = vpop.permute.xlu0 %652
      %655 = vset.pattern.permute.xlu0 3
      %656 = vperm.xlu0 %655, %v370
      %v657 = vpop.permute.xlu0 %656
      %659 = vset.pattern.permute.xlu0 3
      %660 = vperm.xlu0 %659, %v371
      %v661 = vpop.permute.xlu0 %660
      %663 = vset.pattern.permute.xlu0 3
      %664 = vperm.xlu0 %663, %v372
      %v665 = vpop.permute.xlu0 %664
      %667 = vset.pattern.permute.xlu0 3
      %668 = vperm.xlu0 %667, %v373
      %v669 = vpop.permute.xlu0 %668
      %671 = vset.pattern.permute.xlu0 3
      %672 = vperm.xlu0 %671, %v374
      %v673 = vpop.permute.xlu0 %672
      %675 = vset.pattern.permute.xlu0 3
      %676 = vperm.xlu0 %675, %v375
      %v677 = vpop.permute.xlu0 %676
      %679 = vset.pattern.permute.xlu0 3
      %680 = vperm.xlu0 %679, %v376
      %v681 = vpop.permute.xlu0 %680
      %v683 = vadd.f32 %v643, %v653
      %v684 = vadd.f32 %v644, %v657
      %v685 = vadd.f32 %v645, %v661
      %v686 = vadd.f32 %v646, %v665
      %v687 = vadd.f32 %v647, %v669
      %v688 = vadd.f32 %v648, %v673
      %v689 = vadd.f32 %v649, %v677
      %v690 = vadd.f32 %v650, %v681
      %v691 = vmax.f32 %v683, 0.0
      %v692 = vmax.f32 %v684, 0.0
      %v693 = vmax.f32 %v685, 0.0
      %v694 = vmax.f32 %v686, 0.0
      %v695 = vmax.f32 %v687, 0.0
      %v696 = vmax.f32 %v688, 0.0
      %v697 = vmax.f32 %v689, 0.0
      %v698 = vmax.f32 %v690, 0.0
      %vm699 = vcmask 130048
      %700 = vst.msk [vmem:[%s225] sm:$0xff] %vm699, %v691
      %701 = vst.msk [vmem:[%s225 + $0x8] sm:$0xff] %vm699, %v692
      %702 = vst.msk [vmem:[%s225 + $0x10] sm:$0xff] %vm699, %v693
      %703 = vst.msk [vmem:[%s225 + $0x18] sm:$0xff] %vm699, %v694
      %704 = vst.msk [vmem:[%s225 + $0x20] sm:$0xff] %vm699, %v695
      %705 = vst.msk [vmem:[%s225 + $0x28] sm:$0xff] %vm699, %v696
      %706 = vst.msk [vmem:[%s225 + $0x30] sm:$0xff] %vm699, %v697
      %707 = vst.msk [vmem:[%s225 + $0x38] sm:$0xff] %vm699, %v698
      %p708 = scmp.lt.s32.totalorder %s19, 1
      %s709 = scalar_select %p708, %s19, 1
      %p710 = scmp.lt.s32.totalorder %s20, 0
      %s711 = scalar_select %p710, %s20, 0
      %s712 = smul.addr %s709, 8
      %s713 = sadd.s32 %s711, %s712
      %s714 = smul.addr %s713, 8
      %s715 = scalar_lea.vmem %s4, %s714
      // Predicated region
      $region37: #{s_mlp_1_forward.5} parent=35 // pred_check
        %p716 = pneg %p138
      $region38: #{s_mlp_1_forward.5} parent=35 // pred_check_branch
        %718 = sbr.rel (%p716) target = $region40
      $region39: #{s_mlp_1_forward.5} parent=35 // pred_region
        _
      $region40: #{s_mlp_1_forward.5} parent=35 // pred_fallthru
        _
    $region36: #{s_mlp_1_forward.5} parent=5 // pred_fallthru
      _
    %p719 = scmp.le.s32.totalorder 2, %s10
    // Predicated region
    $region41: #{s_mlp_1_forward.5} parent=5 // pred_check
      %p720 = pneg %p719
    $region42: #{s_mlp_1_forward.5} parent=5 // pred_check_branch
      %722 = sbr.rel (%p720) target = $region44
    $region43: #{s_mlp_1_forward.5} parent=5 // pred_region
      %s723 = ssub.s32 %s10, 2
      // Predicated region
      $region45: #{s_mlp_1_forward.5} parent=43 // pred_check
        %p724 = pneg %p144
      $region46: #{s_mlp_1_forward.5} parent=43 // pred_check_branch
        %726 = sbr.rel (%p724) target = $region48
      $region47: #{s_mlp_1_forward.5} parent=43 // pred_region
        %p727 = scmp.lt.s32.totalorder %s21, 1
        %s728 = scalar_select %p727, %s21, 1
        %p729 = scmp.lt.s32.totalorder %s22, 0
        %s730 = scalar_select %p729, %s22, 0
        %s731 = smul.addr %s728, 8
        %s732 = sadd.s32 %s730, %s731
        %s733 = smul.addr %s732, 8
        %s734 = scalar_lea.vmem %s4, %s733
      $region48: #{s_mlp_1_forward.5} parent=43 // pred_fallthru
        _
    $region44: #{s_mlp_1_forward.5} parent=5 // pred_fallthru
      _
  $region6: #{s_mlp_1_forward.5} parent=0 // loop_footer
    %s14 = sadd.s32 1, %s10
  $region7: #{s_mlp_1_forward.5} parent=0 // loop_footer_branch
    %9 = sbr.rel target = $region3
  $region8: #{s_mlp_1_forward.5} parent=0 // loop_exit
    _

</llo_original>
